<compile_context>
chip_gen: v7x
topology: tpu7x:2x2x1
jax: 0.10.0
libtpu: 0.0.40
codegen_flags: <defaults>
</compile_context>

<pallas_src>
import jax
import jax.numpy as jnp
from jax.experimental import pallas as pl
from jax.experimental.pallas import tpu as pltpu


def _round_up(x, m):
    return (x + m - 1) // m * m


# -----------------------------------------------------------------------------
# BaseAgent.forward: abstract body is `return x`.  No parameters -> no kernel.
# Emitting an identity pallas_call would only add an HBM->VMEM->HBM round trip;
# the categorical kernel below reads the same logits directly from HBM.
# TODO(synk): concrete subclasses would add policy/value heads here.
# -----------------------------------------------------------------------------
def forward(x):
    return x


# -----------------------------------------------------------------------------
# Fused Categorical(logits).log_prob(actions) + .entropy() kernel.
# Per-row math (no materialized probs/log_probs, no full-width divide):
#   m   = max_j logits[i, j]
#   e_j = exp(logits[i, j] - m)
#   s1  = sum_j e_j                 s2 = sum_j e_j * (logits[i, j] - m)
#   logp_i = logits[i, a_i] - (m + log s1)
#   ent_i  = log s1 - s2 / s1
# Both results are packed into a single (TB, 2) store (col 0 = logp,
# col 1 = entropy) to avoid two separate last-dim-1 masked-store streams.
# TODO(synk): for very small action counts (A << 128) an additional win is
#             lane-packing 128//A rows per vreg with segmented reductions.
# -----------------------------------------------------------------------------
def _categorical_kernel(actions_ref, logits_ref, out_ref):
    logits = logits_ref[...]                                    # (TB, A) f32
    acts = actions_ref[...]                                     # (TB, 1) i32
    TB, A = logits.shape

    m = jnp.max(logits, axis=-1, keepdims=True)                 # (TB, 1)
    shifted = logits - m                                        # (TB, A)
    e = jnp.exp(shifted)                                        # (TB, A)
    s1 = jnp.sum(e, axis=-1, keepdims=True)                     # (TB, 1)
    s2 = jnp.sum(e * shifted, axis=-1, keepdims=True)           # (TB, 1)
    log_s1 = jnp.log(s1)                                        # (TB, 1)
    # exact (non-approx) reciprocal to keep parity with torch Categorical
    inv_s1 = pl.reciprocal(s1, approx=False)                    # (TB, 1)

    ent = log_s1 - s2 * inv_s1                                  # (TB, 1)

    # one-hot masked-sum gather of the chosen-action logit (iota hoisted,
    # gather lowering would be far worse on TPU)
    col = jax.lax.broadcasted_iota(jnp.int32, (TB, A), 1)
    onehot = (col == acts).astype(logits.dtype)
    chosen = jnp.sum(onehot * logits, axis=-1, keepdims=True)   # (TB, 1)
    logp = chosen - (m + log_s1)                                # (TB, 1)

    # single combined (TB, 2) write: col 0 = log_prob, col 1 = entropy
    sel = jax.lax.broadcasted_iota(jnp.int32, (TB, 2), 1) == 0
    out_ref[...] = jnp.where(sel, logp, ent)


def categorical_logprob_entropy(logits, actions, *, block_rows=512):
    """Per-row Categorical log_prob(actions) and entropy via one Pallas kernel."""
    B, A = logits.shape
    logits = logits.astype(jnp.float32)
    actions = actions.reshape(B).astype(jnp.int32)

    # Pad the batch to a sublane-friendly multiple of the row tile so every
    # block is (8k, A)-shaped; padded rows are dropped after the call.
    Bp = _round_up(B, 8)
    TB = min(block_rows, Bp)
    Bp = _round_up(Bp, TB)
    if Bp != B:
        pad = Bp - B
        logits = jnp.pad(logits, ((0, pad), (0, 0)))
        actions = jnp.pad(actions, ((0, pad),))
    actions_2d = actions.reshape(Bp, 1)

    out = pl.pallas_call(
        _categorical_kernel,
        out_shape=jax.ShapeDtypeStruct((Bp, 2), jnp.float32),
        grid_spec=pltpu.PrefetchScalarGridSpec(
            num_scalar_prefetch=0,
            grid=(Bp // TB,),                      # 1-D batch grid -> pipelined
            in_specs=[
                pl.BlockSpec((TB, 1), lambda i: (i, 0)),   # actions
                pl.BlockSpec((TB, A), lambda i: (i, 0)),   # logits
            ],
            out_specs=pl.BlockSpec((TB, 2), lambda i: (i, 0)),
        ),
        compiler_params=pltpu.CompilerParams(
            # parallel batch axis: double-buffered pipelining on v5e/v6e and
            # megacore sharding across v7x's two TensorCores.
            dimension_semantics=("parallel",),
        ),
    )(actions_2d, logits)

    return out[:B, 0], out[:B, 1]


# -----------------------------------------------------------------------------
# Python-side glue mirroring BaseAgent helpers
# -----------------------------------------------------------------------------
def _format(states):
    """BaseAgent._format: ensure float32 2-D array (plain JAX glue)."""
    x = jnp.asarray(states, dtype=jnp.float32)
    if x.ndim == 1:
        x = x[None, :]
    return x


def get_predictions_ppo(states, actions):
    """BaseAgent.get_predictions_ppo with identity forward (abstract base)."""
    x = _format(states)
    logits = forward(x)                       # identity; no copy kernel emitted
    logpas, entropies = categorical_logprob_entropy(logits, actions)
    return logpas, entropies, logits          # identity forward has no value head


def _reference(states, actions):
    logits = jnp.asarray(states, jnp.float32)
    log_probs = jax.nn.log_softmax(logits, axis=-1)
    probs = jax.nn.softmax(logits, axis=-1)
    logpas = jnp.take_along_axis(log_probs, actions[:, None], axis=-1)[:, 0]
    ent = -jnp.sum(probs * log_probs, axis=-1)
    return logpas, ent


if __name__ == "__main__":
    key = jax.random.PRNGKey(0)
    B, A = 1000, 16  # non-multiple-of-tile batch exercises padding + 2-step grid
    k1, k2 = jax.random.split(key)
    states = jax.random.normal(k1, (B, A), dtype=jnp.float32)
    actions = jax.random.randint(k2, (B,), 0, A, dtype=jnp.int32)

    logpas, entropies, values = get_predictions_ppo(states, actions)
    jax.block_until_ready((logpas, entropies, values))

    ref_logpas, ref_ent = _reference(states, actions)
    assert logpas.shape == (B,) and entropies.shape == (B,)
    assert jnp.allclose(logpas, ref_logpas, atol=1e-5), "log_prob mismatch"
    assert jnp.allclose(entropies, ref_ent, atol=1e-5), "entropy mismatch"
    assert jnp.array_equal(values, states), "identity forward mismatch"

    print("KERNEL_OK")
</pallas_src>

<mosaic_0001>
module attributes {stable_mosaic.version = 11 : i64} {
  func.func @_categorical_kernel(%arg0: i32, %arg1: memref<512x1xi32, #tpu.memory_space<vmem>>, %arg2: memref<512x16xf32, #tpu.memory_space<vmem>>, %arg3: memref<512x2xf32, #tpu.memory_space<vmem>>) attributes {dimension_semantics = [#tpu.dimension_semantics<parallel>], iteration_bounds = array<i64: 2>, scalar_prefetch = 0 : i64, scratch_operands = 0 : i64, tpu.core_type = #tpu.core_type<tc>, window_params = [{transform_indices = @transform_0, window_bounds = array<i64: 512, 1>}, {transform_indices = @transform_1, window_bounds = array<i64: 512, 16>}, {transform_indices = @transform_2, window_bounds = array<i64: 512, 2>}]} {
    %c0 = arith.constant 0 : index
    %c0_0 = arith.constant 0 : index
    %0 = vector.load %arg2[%c0, %c0_0] : memref<512x16xf32, #tpu.memory_space<vmem>>, vector<512x16xf32>
    %c0_1 = arith.constant 0 : index
    %c0_2 = arith.constant 0 : index
    %1 = vector.load %arg1[%c0_1, %c0_2] : memref<512x1xi32, #tpu.memory_space<vmem>>, vector<512x1xi32>
    %cst = arith.constant dense<0xFF800000> : vector<512xf32>
    %2 = vector.multi_reduction <maximumf>, %0, %cst [1] : vector<512x16xf32> to vector<512xf32>
    %3 = vector.shape_cast %2 : vector<512xf32> to vector<512x1xf32>
    %4 = vector.broadcast %3 : vector<512x1xf32> to vector<512x16xf32>
    %5 = arith.subf %0, %4 : vector<512x16xf32>
    %6 = math.exp %5 : vector<512x16xf32>
    %cst_3 = arith.constant dense<0.000000e+00> : vector<512xf32>
    %7 = vector.multi_reduction <add>, %6, %cst_3 [1] : vector<512x16xf32> to vector<512xf32>
    %8 = vector.shape_cast %7 : vector<512xf32> to vector<512x1xf32>
    %9 = arith.mulf %6, %5 : vector<512x16xf32>
    %cst_4 = arith.constant dense<0.000000e+00> : vector<512xf32>
    %10 = vector.multi_reduction <add>, %9, %cst_4 [1] : vector<512x16xf32> to vector<512xf32>
    %11 = vector.shape_cast %10 : vector<512xf32> to vector<512x1xf32>
    %12 = math.log %8 : vector<512x1xf32>
    %13 = tpu.reciprocal %8 : vector<512x1xf32> -> vector<512x1xf32>
    %14 = arith.mulf %11, %13 : vector<512x1xf32>
    %15 = arith.subf %12, %14 : vector<512x1xf32>
    %16 = tpu.iota {dimensions = array<i32: 1>} : vector<512x16xi32>
    %17 = vector.broadcast %1 : vector<512x1xi32> to vector<512x16xi32>
    %18 = arith.cmpi eq, %16, %17 : vector<512x16xi32>
    %19 = arith.extui %18 : vector<512x16xi1> to vector<512x16xi32>
    %20 = arith.sitofp %19 : vector<512x16xi32> to vector<512x16xf32>
    %21 = arith.mulf %20, %0 : vector<512x16xf32>
    %cst_5 = arith.constant dense<0.000000e+00> : vector<512xf32>
    %22 = vector.multi_reduction <add>, %21, %cst_5 [1] : vector<512x16xf32> to vector<512xf32>
    %23 = vector.shape_cast %22 : vector<512xf32> to vector<512x1xf32>
    %24 = arith.addf %3, %12 : vector<512x1xf32>
    %25 = arith.subf %23, %24 : vector<512x1xf32>
    %26 = tpu.iota {dimensions = array<i32: 1>} : vector<512x2xi32>
    %c0_i32 = arith.constant 0 : i32
    %27 = vector.broadcast %c0_i32 : i32 to vector<512x2xi32>
    %28 = arith.cmpi eq, %26, %27 : vector<512x2xi32>
    %29 = vector.shape_cast %25 : vector<512x1xf32> to vector<512x1xf32>
    %30 = vector.broadcast %29 : vector<512x1xf32> to vector<512x2xf32>
    %31 = vector.shape_cast %15 : vector<512x1xf32> to vector<512x1xf32>
    %32 = vector.broadcast %31 : vector<512x1xf32> to vector<512x2xf32>
    %33 = arith.select %28, %30, %32 : vector<512x2xi1>, vector<512x2xf32>
    %c0_6 = arith.constant 0 : index
    %c0_7 = arith.constant 0 : index
    %34 = vector.load %arg3[%c0_6, %c0_7] : memref<512x2xf32, #tpu.memory_space<vmem>>, vector<512x2xf32>
    tpu.vector_store %arg3[%c0_6, %c0_7], %33 {strides = array<i32>} : memref<512x2xf32, #tpu.memory_space<vmem>>, vector<512x2xf32>,
    return
  }
  func.func @transform_0(%arg0: i32) -> (i32, i32) {
    %c0_i32 = arith.constant 0 : i32
    %c0_i32_0 = arith.constant 0 : i32
    return %arg0, %c0_i32 : i32, i32
  }
  func.func @transform_1(%arg0: i32) -> (i32, i32) {
    %c0_i32 = arith.constant 0 : i32
    %c0_i32_0 = arith.constant 0 : i32
    return %arg0, %c0_i32 : i32, i32
  }
  func.func @transform_2(%arg0: i32) -> (i32, i32) {
    %c0_i32 = arith.constant 0 : i32
    %c0_i32_0 = arith.constant 0 : i32
    return %arg0, %c0_i32 : i32, i32
  }
}

</mosaic_0001>

<llo_original>
// kernel: tpu_custom_call.1
$region0: #{tpu_custom_call.1}
  #allocation0 [shape = 'u32[]', space=smem, size = 0x4, offset = 0x4, fixed_abs, tag = 'smem constant byte address 0x4 - core index']
  #allocation1 [shape = 'u32[144,128]{1,0:T(1,128)}', space=vmem, size = 0x12000, scoped, tag = 'internal scratch']
  %s0 = inlined_call_operand.vmem [shape: s32[1024,1], index: 0, kind: input, shape index: {}]
  %s1 = inlined_call_operand.vmem [shape: f32[1024,16], index: 1, kind: input, shape index: {}]
  %s2 = inlined_call_operand.vmem [shape: f32[1024,2], index: 2, kind: output, shape index: {}]
  %s3 = sld [smem:[#allocation0]]
  $region41: #{tpu_custom_call.1} parent=0
    _
  %s5 = ssub.s32 1, %s3
  %s6 = scalar_select 0, %s5, %s3
  loop: start=0, step=1, limit=4
  $region2: #{tpu_custom_call.1} parent=0 // loop_pre_header
    _
  $region3: #{tpu_custom_call.1} parent=0 // loop_header
    %s8 = sphi 0, %s12
    %p9 = scmp.ge.s32.totalorder %s8, 4
    %s18 = sphi 0, %s20
    %s21 = sphi 0, %s18
    %s22 = sphi 0, %s21
    %s38 = sphi 0, %s22
    %s44 = sphi 0, %s46
    %s47 = sphi 0, %s44
    %s48 = sphi 0, %s47
    %s64 = sphi 0, %s48
    %s70 = sphi 0, %s72
    %s73 = sphi 0, %s70
    %s74 = sphi 0, %s73
    %s90 = sphi 0, %s74
  $region4: #{tpu_custom_call.1} parent=0 // loop_header_branch
    %11 = sbr.rel (%p9) target = $region8
  $region5: #{tpu_custom_call.1} parent=0 // loop_body
    %s13 = ssub.s32 %s8, 1
    %s14 = ssub.s32 %s8, 2
    %s15 = sadd.s32 %s8, 1
    %s16 = ssub.s32 %s8, %s15
    %p17 = scmp.eq.s32.totalorder %s16, 0
    %s19 = sadd.s32 %s18, 1
    %s20 = scalar_select %p17, %s18, %s19
    %p23 = pneg %p17
    %p24 = scmp.eq.s32.totalorder %s8, 1
    %p25 = por %p23, %p24
    %p26 = scmp.ne.s32.totalorder %s18, %s21
    %p27 = scmp.eq.s32.totalorder %s8, 0
    %p28 = por %p26, %p27
    %p29 = scmp.ne.s32.totalorder %s18, %s21
    %p30 = scmp.eq.s32.totalorder %s13, 1
    %p31 = por %p29, %p30
    %p32 = scmp.ne.s32.totalorder %s21, %s22
    %p33 = scmp.eq.s32.totalorder %s13, 0
    %p34 = por %p32, %p33
    %p35 = scmp.ne.s32.totalorder %s21, %s22
    %p36 = scmp.eq.s32.totalorder %s14, 1
    %p37 = por %p35, %p36
    %p39 = scmp.ne.s32.totalorder %s22, %s38
    %p40 = scmp.eq.s32.totalorder %s14, 0
    %p41 = por %p39, %p40
    %s42 = ssub.s32 %s8, %s15
    %p43 = scmp.eq.s32.totalorder %s42, 0
    %s45 = sadd.s32 %s44, 1
    %s46 = scalar_select %p43, %s44, %s45
    %p49 = pneg %p43
    %p50 = scmp.eq.s32.totalorder %s8, 1
    %p51 = por %p49, %p50
    %p52 = scmp.ne.s32.totalorder %s44, %s47
    %p53 = scmp.eq.s32.totalorder %s8, 0
    %p54 = por %p52, %p53
    %p55 = scmp.ne.s32.totalorder %s44, %s47
    %p56 = scmp.eq.s32.totalorder %s13, 1
    %p57 = por %p55, %p56
    %p58 = scmp.ne.s32.totalorder %s47, %s48
    %p59 = scmp.eq.s32.totalorder %s13, 0
    %p60 = por %p58, %p59
    %p61 = scmp.ne.s32.totalorder %s47, %s48
    %p62 = scmp.eq.s32.totalorder %s14, 1
    %p63 = por %p61, %p62
    %p65 = scmp.ne.s32.totalorder %s48, %s64
    %p66 = scmp.eq.s32.totalorder %s14, 0
    %p67 = por %p65, %p66
    %s68 = ssub.s32 %s8, %s15
    %p69 = scmp.eq.s32.totalorder %s68, 0
    %s71 = sadd.s32 %s70, 1
    %s72 = scalar_select %p69, %s70, %s71
    %p75 = pneg %p69
    %p76 = scmp.eq.s32.totalorder %s8, 1
    %p77 = por %p75, %p76
    %p78 = scmp.ne.s32.totalorder %s70, %s73
    %p79 = scmp.eq.s32.totalorder %s8, 0
    %p80 = por %p78, %p79
    %p81 = scmp.ne.s32.totalorder %s70, %s73
    %p82 = scmp.eq.s32.totalorder %s13, 1
    %p83 = por %p81, %p82
    %p84 = scmp.ne.s32.totalorder %s73, %s74
    %p85 = scmp.eq.s32.totalorder %s13, 0
    %p86 = por %p84, %p85
    %p87 = scmp.ne.s32.totalorder %s73, %s74
    %p88 = scmp.eq.s32.totalorder %s14, 1
    %p89 = por %p87, %p88
    %p91 = scmp.ne.s32.totalorder %s74, %s90
    %p92 = scmp.eq.s32.totalorder %s14, 0
    %p93 = por %p91, %p92
    %p94 = scmp.le.s32.totalorder 1, %s8
    %p95 = scmp.lt.s32.totalorder %s8, 3
    %p96 = pnand %p94, %p95
    %p97 = pneg %p96
    // Predicated region
    $region9: #{tpu_custom_call.1} parent=5 // pred_check
      _
    $region10: #{tpu_custom_call.1} parent=5 // pred_check_branch
      %99 = sbr.rel (%p96) target = $region12
    $region11: #{tpu_custom_call.1} parent=5 // pred_region
      %s100 = ssub.s32 %s8, 1
    $region12: #{tpu_custom_call.1} parent=5 // pred_fallthru
      _
    %p101 = scmp.lt.s32.totalorder %s8, 2
    // Predicated region
    $region13: #{tpu_custom_call.1} parent=5 // pred_check
      %p102 = pneg %p101
    $region14: #{tpu_custom_call.1} parent=5 // pred_check_branch
      %104 = sbr.rel (%p102) target = $region16
    $region15: #{tpu_custom_call.1} parent=5 // pred_region
      // Predicated region
      $region17: #{tpu_custom_call.1} parent=15 // pred_check
        %p105 = pneg %p28
      $region18: #{tpu_custom_call.1} parent=15 // pred_check_branch
        %107 = sbr.rel (%p105) target = $region20
      $region19: #{tpu_custom_call.1} parent=15 // pred_region
        %s108 = smul.u32 64, %s8
        %p109 = scmp.lt.s32.totalorder %s108, 127
        %s110 = scalar_select %p109, %s108, 127
        %s111 = smul.addr %s110, 8
        %s112 = scalar_lea.vmem %s0, %s111
        %s113 = smul.u32 64, %s8
      $region20: #{tpu_custom_call.1} parent=15 // pred_fallthru
        _
      // Predicated region
      $region21: #{tpu_custom_call.1} parent=15 // pred_check
        %p114 = pneg %p54
      $region22: #{tpu_custom_call.1} parent=15 // pred_check_branch
        %116 = sbr.rel (%p114) target = $region24
      $region23: #{tpu_custom_call.1} parent=15 // pred_region
        %s117 = smul.u32 64, %s8
        %p118 = scmp.lt.s32.totalorder %s117, 127
        %s119 = scalar_select %p118, %s117, 127
        %s120 = smul.addr %s119, 8
        %s121 = scalar_lea.vmem %s1, %s120
        %s122 = smul.u32 64, %s8
      $region24: #{tpu_custom_call.1} parent=15 // pred_fallthru
        _
    $region16: #{tpu_custom_call.1} parent=5 // pred_fallthru
      _
    %p123 = scmp.le.s32.totalorder 1, %s8
    %p124 = scmp.lt.s32.totalorder %s8, 3
    %p125 = pnand %p123, %p124
    %p126 = pneg %p125
    // Predicated region
    $region25: #{tpu_custom_call.1} parent=5 // pred_check
      _
    $region26: #{tpu_custom_call.1} parent=5 // pred_check_branch
      %128 = sbr.rel (%p125) target = $region28
    $region27: #{tpu_custom_call.1} parent=5 // pred_region
      %s129 = ssub.s32 %s8, 1
      %s130 = smul.u32 64, %s13
      %p131 = scmp.lt.s32.totalorder %s130, 127
      %s132 = scalar_select %p131, %s130, 127
      %s133 = smul.addr %s132, 8
      %s134 = scalar_lea.vmem %s0, %s133
      %p135 = pneg %p34
      %p136 = pneg %p31
      %s137 = smul.u32 64, %s13
      %p138 = scmp.lt.s32.totalorder %s137, 127
      %s139 = scalar_select %p138, %s137, 127
      %s140 = smul.addr %s139, 8
      %s141 = scalar_lea.vmem %s1, %s140
      %p142 = pneg %p60
      %p143 = pneg %p57
      %p144 = pneg %p86
      %p145 = pneg %p83
      %s146 = smul.u32 64, %s13
      %p147 = scmp.lt.s32.totalorder %s146, 127
      %s148 = scalar_select %p147, %s146, 127
      %s149 = smul.addr %s148, 8
      %s150 = scalar_lea.vmem %s2, %s149
      %s151 = smul.u32 64, %s13
      %p152 = scmp.lt.s32.totalorder %s151, 127
      %s153 = scalar_select %p152, %s151, 127
      %s154 = smul.addr %s153, 8
      %s155 = scalar_lea.vmem %s0, %s154
      %s156 = smul.u32 64, %s13
      %s157 = smul.u32 64, %s13
      %p158 = scmp.lt.s32.totalorder %s157, 127
      %s159 = scalar_select %p158, %s157, 127
      %s160 = smul.addr %s159, 8
      %s161 = scalar_lea.vmem %s1, %s160
      %s162 = smul.u32 64, %s13
      %s163 = smul.u32 64, %s13
      %p164 = scmp.lt.s32.totalorder %s163, 127
      %s165 = scalar_select %p164, %s163, 127
      %s166 = smul.addr %s165, 8
      %s167 = scalar_lea.vmem %s2, %s166
      %s168 = smul.u32 64, %s13
      %v169 = vld [vmem:[%s161] sm:$0xff]
      %v170 = vld [vmem:[%s161 + $0x8] sm:$0xff]
      %v171 = vld [vmem:[%s161 + $0x10] sm:$0xff]
      %v172 = vld [vmem:[%s161 + $0x18] sm:$0xff]
      %v173 = vld [vmem:[%s161 + $0x20] sm:$0xff]
      %v174 = vld [vmem:[%s161 + $0x28] sm:$0xff]
      %v175 = vld [vmem:[%s161 + $0x30] sm:$0xff]
      %v176 = vld [vmem:[%s161 + $0x38] sm:$0xff]
      %v177 = vld [vmem:[%s161 + $0x40] sm:$0xff]
      %v178 = vld [vmem:[%s161 + $0x48] sm:$0xff]
      %v179 = vld [vmem:[%s161 + $0x50] sm:$0xff]
      %v180 = vld [vmem:[%s161 + $0x58] sm:$0xff]
      %v181 = vld [vmem:[%s161 + $0x60] sm:$0xff]
      %v182 = vld [vmem:[%s161 + $0x68] sm:$0xff]
      %v183 = vld [vmem:[%s161 + $0x70] sm:$0xff]
      %v184 = vld [vmem:[%s161 + $0x78] sm:$0xff]
      %v185 = vld [vmem:[%s161 + $0x80] sm:$0xff]
      %v186 = vld [vmem:[%s161 + $0x88] sm:$0xff]
      %v187 = vld [vmem:[%s161 + $0x90] sm:$0xff]
      %v188 = vld [vmem:[%s161 + $0x98] sm:$0xff]
      %v189 = vld [vmem:[%s161 + $0xa0] sm:$0xff]
      %v190 = vld [vmem:[%s161 + $0xa8] sm:$0xff]
      %v191 = vld [vmem:[%s161 + $0xb0] sm:$0xff]
      %v192 = vld [vmem:[%s161 + $0xb8] sm:$0xff]
      %v193 = vld [vmem:[%s161 + $0xc0] sm:$0xff]
      %v194 = vld [vmem:[%s161 + $0xc8] sm:$0xff]
      %v195 = vld [vmem:[%s161 + $0xd0] sm:$0xff]
      %v196 = vld [vmem:[%s161 + $0xd8] sm:$0xff]
      %v197 = vld [vmem:[%s161 + $0xe0] sm:$0xff]
      %v198 = vld [vmem:[%s161 + $0xe8] sm:$0xff]
      %v199 = vld [vmem:[%s161 + $0xf0] sm:$0xff]
      %v200 = vld [vmem:[%s161 + $0xf8] sm:$0xff]
      %v201 = vld [vmem:[%s161 + $0x100] sm:$0xff]
      %v202 = vld [vmem:[%s161 + $0x108] sm:$0xff]
      %v203 = vld [vmem:[%s161 + $0x110] sm:$0xff]
      %v204 = vld [vmem:[%s161 + $0x118] sm:$0xff]
      %v205 = vld [vmem:[%s161 + $0x120] sm:$0xff]
      %v206 = vld [vmem:[%s161 + $0x128] sm:$0xff]
      %v207 = vld [vmem:[%s161 + $0x130] sm:$0xff]
      %v208 = vld [vmem:[%s161 + $0x138] sm:$0xff]
      %v209 = vld [vmem:[%s161 + $0x140] sm:$0xff]
      %v210 = vld [vmem:[%s161 + $0x148] sm:$0xff]
      %v211 = vld [vmem:[%s161 + $0x150] sm:$0xff]
      %v212 = vld [vmem:[%s161 + $0x158] sm:$0xff]
      %v213 = vld [vmem:[%s161 + $0x160] sm:$0xff]
      %v214 = vld [vmem:[%s161 + $0x168] sm:$0xff]
      %v215 = vld [vmem:[%s161 + $0x170] sm:$0xff]
      %v216 = vld [vmem:[%s161 + $0x178] sm:$0xff]
      %v217 = vld [vmem:[%s161 + $0x180] sm:$0xff]
      %v218 = vld [vmem:[%s161 + $0x188] sm:$0xff]
      %v219 = vld [vmem:[%s161 + $0x190] sm:$0xff]
      %v220 = vld [vmem:[%s161 + $0x198] sm:$0xff]
      %v221 = vld [vmem:[%s161 + $0x1a0] sm:$0xff]
      %v222 = vld [vmem:[%s161 + $0x1a8] sm:$0xff]
      %v223 = vld [vmem:[%s161 + $0x1b0] sm:$0xff]
      %v224 = vld [vmem:[%s161 + $0x1b8] sm:$0xff]
      %v225 = vld [vmem:[%s161 + $0x1c0] sm:$0xff]
      %v226 = vld [vmem:[%s161 + $0x1c8] sm:$0xff]
      %v227 = vld [vmem:[%s161 + $0x1d0] sm:$0xff]
      %v228 = vld [vmem:[%s161 + $0x1d8] sm:$0xff]
      %v229 = vld [vmem:[%s161 + $0x1e0] sm:$0xff]
      %v230 = vld [vmem:[%s161 + $0x1e8] sm:$0xff]
      %v231 = vld [vmem:[%s161 + $0x1f0] sm:$0xff]
      %v232 = vld [vmem:[%s161 + $0x1f8] sm:$0xff]
      %v233 = vld [vmem:[%s155] sm:$0xff]
      %v234 = vld [vmem:[%s155 + $0x8] sm:$0xff]
      %v235 = vld [vmem:[%s155 + $0x10] sm:$0xff]
      %v236 = vld [vmem:[%s155 + $0x18] sm:$0xff]
      %v237 = vld [vmem:[%s155 + $0x20] sm:$0xff]
      %v238 = vld [vmem:[%s155 + $0x28] sm:$0xff]
      %v239 = vld [vmem:[%s155 + $0x30] sm:$0xff]
      %v240 = vld [vmem:[%s155 + $0x38] sm:$0xff]
      %v241 = vld [vmem:[%s155 + $0x40] sm:$0xff]
      %v242 = vld [vmem:[%s155 + $0x48] sm:$0xff]
      %v243 = vld [vmem:[%s155 + $0x50] sm:$0xff]
      %v244 = vld [vmem:[%s155 + $0x58] sm:$0xff]
      %v245 = vld [vmem:[%s155 + $0x60] sm:$0xff]
      %v246 = vld [vmem:[%s155 + $0x68] sm:$0xff]
      %v247 = vld [vmem:[%s155 + $0x70] sm:$0xff]
      %v248 = vld [vmem:[%s155 + $0x78] sm:$0xff]
      %v249 = vld [vmem:[%s155 + $0x80] sm:$0xff]
      %v250 = vld [vmem:[%s155 + $0x88] sm:$0xff]
      %v251 = vld [vmem:[%s155 + $0x90] sm:$0xff]
      %v252 = vld [vmem:[%s155 + $0x98] sm:$0xff]
      %v253 = vld [vmem:[%s155 + $0xa0] sm:$0xff]
      %v254 = vld [vmem:[%s155 + $0xa8] sm:$0xff]
      %v255 = vld [vmem:[%s155 + $0xb0] sm:$0xff]
      %v256 = vld [vmem:[%s155 + $0xb8] sm:$0xff]
      %v257 = vld [vmem:[%s155 + $0xc0] sm:$0xff]
      %v258 = vld [vmem:[%s155 + $0xc8] sm:$0xff]
      %v259 = vld [vmem:[%s155 + $0xd0] sm:$0xff]
      %v260 = vld [vmem:[%s155 + $0xd8] sm:$0xff]
      %v261 = vld [vmem:[%s155 + $0xe0] sm:$0xff]
      %v262 = vld [vmem:[%s155 + $0xe8] sm:$0xff]
      %v263 = vld [vmem:[%s155 + $0xf0] sm:$0xff]
      %v264 = vld [vmem:[%s155 + $0xf8] sm:$0xff]
      %v265 = vld [vmem:[%s155 + $0x100] sm:$0xff]
      %v266 = vld [vmem:[%s155 + $0x108] sm:$0xff]
      %v267 = vld [vmem:[%s155 + $0x110] sm:$0xff]
      %v268 = vld [vmem:[%s155 + $0x118] sm:$0xff]
      %v269 = vld [vmem:[%s155 + $0x120] sm:$0xff]
      %v270 = vld [vmem:[%s155 + $0x128] sm:$0xff]
      %v271 = vld [vmem:[%s155 + $0x130] sm:$0xff]
      %v272 = vld [vmem:[%s155 + $0x138] sm:$0xff]
      %v273 = vld [vmem:[%s155 + $0x140] sm:$0xff]
      %v274 = vld [vmem:[%s155 + $0x148] sm:$0xff]
      %v275 = vld [vmem:[%s155 + $0x150] sm:$0xff]
      %v276 = vld [vmem:[%s155 + $0x158] sm:$0xff]
      %v277 = vld [vmem:[%s155 + $0x160] sm:$0xff]
      %v278 = vld [vmem:[%s155 + $0x168] sm:$0xff]
      %v279 = vld [vmem:[%s155 + $0x170] sm:$0xff]
      %v280 = vld [vmem:[%s155 + $0x178] sm:$0xff]
      %v281 = vld [vmem:[%s155 + $0x180] sm:$0xff]
      %v282 = vld [vmem:[%s155 + $0x188] sm:$0xff]
      %v283 = vld [vmem:[%s155 + $0x190] sm:$0xff]
      %v284 = vld [vmem:[%s155 + $0x198] sm:$0xff]
      %v285 = vld [vmem:[%s155 + $0x1a0] sm:$0xff]
      %v286 = vld [vmem:[%s155 + $0x1a8] sm:$0xff]
      %v287 = vld [vmem:[%s155 + $0x1b0] sm:$0xff]
      %v288 = vld [vmem:[%s155 + $0x1b8] sm:$0xff]
      %v289 = vld [vmem:[%s155 + $0x1c0] sm:$0xff]
      %v290 = vld [vmem:[%s155 + $0x1c8] sm:$0xff]
      %v291 = vld [vmem:[%s155 + $0x1d0] sm:$0xff]
      %v292 = vld [vmem:[%s155 + $0x1d8] sm:$0xff]
      %v293 = vld [vmem:[%s155 + $0x1e0] sm:$0xff]
      %v294 = vld [vmem:[%s155 + $0x1e8] sm:$0xff]
      %v295 = vld [vmem:[%s155 + $0x1f0] sm:$0xff]
      %v296 = vld [vmem:[%s155 + $0x1f8] sm:$0xff]
      %vm297 = vcmask 130048
      %v298 = vsel %vm297, %v169, -inf
      %299 = vmax.xlane.f32.xlu0 %v298
      %v300 = vpop.xlane.xlu0 %299
      %v301 = vsel %vm297, %v170, -inf
      %302 = vmax.xlane.f32.xlu0 %v301
      %v303 = vpop.xlane.xlu0 %302
      %v304 = vsel %vm297, %v171, -inf
      %305 = vmax.xlane.f32.xlu0 %v304
      %v306 = vpop.xlane.xlu0 %305
      %v307 = vsel %vm297, %v172, -inf
      %308 = vmax.xlane.f32.xlu0 %v307
      %v309 = vpop.xlane.xlu0 %308
      %v310 = vsel %vm297, %v173, -inf
      %311 = vmax.xlane.f32.xlu0 %v310
      %v312 = vpop.xlane.xlu0 %311
      %v313 = vsel %vm297, %v174, -inf
      %314 = vmax.xlane.f32.xlu0 %v313
      %v315 = vpop.xlane.xlu0 %314
      %v316 = vsel %vm297, %v175, -inf
      %317 = vmax.xlane.f32.xlu0 %v316
      %v318 = vpop.xlane.xlu0 %317
      %v319 = vsel %vm297, %v176, -inf
      %320 = vmax.xlane.f32.xlu0 %v319
      %v321 = vpop.xlane.xlu0 %320
      %v322 = vsel %vm297, %v177, -inf
      %323 = vmax.xlane.f32.xlu0 %v322
      %v324 = vpop.xlane.xlu0 %323
      %v325 = vsel %vm297, %v178, -inf
      %326 = vmax.xlane.f32.xlu0 %v325
      %v327 = vpop.xlane.xlu0 %326
      %v328 = vsel %vm297, %v179, -inf
      %329 = vmax.xlane.f32.xlu0 %v328
      %v330 = vpop.xlane.xlu0 %329
      %v331 = vsel %vm297, %v180, -inf
      %332 = vmax.xlane.f32.xlu0 %v331
      %v333 = vpop.xlane.xlu0 %332
      %v334 = vsel %vm297, %v181, -inf
      %335 = vmax.xlane.f32.xlu0 %v334
      %v336 = vpop.xlane.xlu0 %335
      %v337 = vsel %vm297, %v182, -inf
      %338 = vmax.xlane.f32.xlu0 %v337
      %v339 = vpop.xlane.xlu0 %338
      %v340 = vsel %vm297, %v183, -inf
      %341 = vmax.xlane.f32.xlu0 %v340
      %v342 = vpop.xlane.xlu0 %341
      %v343 = vsel %vm297, %v184, -inf
      %344 = vmax.xlane.f32.xlu0 %v343
      %v345 = vpop.xlane.xlu0 %344
      %v346 = vsel %vm297, %v185, -inf
      %347 = vmax.xlane.f32.xlu0 %v346
      %v348 = vpop.xlane.xlu0 %347
      %v349 = vsel %vm297, %v186, -inf
      %350 = vmax.xlane.f32.xlu0 %v349
      %v351 = vpop.xlane.xlu0 %350
      %v352 = vsel %vm297, %v187, -inf
      %353 = vmax.xlane.f32.xlu0 %v352
      %v354 = vpop.xlane.xlu0 %353
      %v355 = vsel %vm297, %v188, -inf
      %356 = vmax.xlane.f32.xlu0 %v355
      %v357 = vpop.xlane.xlu0 %356
      %v358 = vsel %vm297, %v189, -inf
      %359 = vmax.xlane.f32.xlu0 %v358
      %v360 = vpop.xlane.xlu0 %359
      %v361 = vsel %vm297, %v190, -inf
      %362 = vmax.xlane.f32.xlu0 %v361
      %v363 = vpop.xlane.xlu0 %362
      %v364 = vsel %vm297, %v191, -inf
      %365 = vmax.xlane.f32.xlu0 %v364
      %v366 = vpop.xlane.xlu0 %365
      %v367 = vsel %vm297, %v192, -inf
      %368 = vmax.xlane.f32.xlu0 %v367
      %v369 = vpop.xlane.xlu0 %368
      %v370 = vsel %vm297, %v193, -inf
      %371 = vmax.xlane.f32.xlu0 %v370
      %v372 = vpop.xlane.xlu0 %371
      %v373 = vsel %vm297, %v194, -inf
      %374 = vmax.xlane.f32.xlu0 %v373
      %v375 = vpop.xlane.xlu0 %374
      %v376 = vsel %vm297, %v195, -inf
      %377 = vmax.xlane.f32.xlu0 %v376
      %v378 = vpop.xlane.xlu0 %377
      %v379 = vsel %vm297, %v196, -inf
      %380 = vmax.xlane.f32.xlu0 %v379
      %v381 = vpop.xlane.xlu0 %380
      %v382 = vsel %vm297, %v197, -inf
      %383 = vmax.xlane.f32.xlu0 %v382
      %v384 = vpop.xlane.xlu0 %383
      %v385 = vsel %vm297, %v198, -inf
      %386 = vmax.xlane.f32.xlu0 %v385
      %v387 = vpop.xlane.xlu0 %386
      %v388 = vsel %vm297, %v199, -inf
      %389 = vmax.xlane.f32.xlu0 %v388
      %v390 = vpop.xlane.xlu0 %389
      %v391 = vsel %vm297, %v200, -inf
      %392 = vmax.xlane.f32.xlu0 %v391
      %v393 = vpop.xlane.xlu0 %392
      %v394 = vsel %vm297, %v201, -inf
      %395 = vmax.xlane.f32.xlu0 %v394
      %v396 = vpop.xlane.xlu0 %395
      %v397 = vsel %vm297, %v202, -inf
      %398 = vmax.xlane.f32.xlu0 %v397
      %v399 = vpop.xlane.xlu0 %398
      %v400 = vsel %vm297, %v203, -inf
      %401 = vmax.xlane.f32.xlu0 %v400
      %v402 = vpop.xlane.xlu0 %401
      %v403 = vsel %vm297, %v204, -inf
      %404 = vmax.xlane.f32.xlu0 %v403
      %v405 = vpop.xlane.xlu0 %404
      %v406 = vsel %vm297, %v205, -inf
      %407 = vmax.xlane.f32.xlu0 %v406
      %v408 = vpop.xlane.xlu0 %407
      %v409 = vsel %vm297, %v206, -inf
      %410 = vmax.xlane.f32.xlu0 %v409
      %v411 = vpop.xlane.xlu0 %410
      %v412 = vsel %vm297, %v207, -inf
      %413 = vmax.xlane.f32.xlu0 %v412
      %v414 = vpop.xlane.xlu0 %413
      %v415 = vsel %vm297, %v208, -inf
      %416 = vmax.xlane.f32.xlu0 %v415
      %v417 = vpop.xlane.xlu0 %416
      %v418 = vsel %vm297, %v209, -inf
      %419 = vmax.xlane.f32.xlu0 %v418
      %v420 = vpop.xlane.xlu0 %419
      %v421 = vsel %vm297, %v210, -inf
      %422 = vmax.xlane.f32.xlu0 %v421
      %v423 = vpop.xlane.xlu0 %422
      %v424 = vsel %vm297, %v211, -inf
      %425 = vmax.xlane.f32.xlu0 %v424
      %v426 = vpop.xlane.xlu0 %425
      %v427 = vsel %vm297, %v212, -inf
      %428 = vmax.xlane.f32.xlu0 %v427
      %v429 = vpop.xlane.xlu0 %428
      %v430 = vsel %vm297, %v213, -inf
      %431 = vmax.xlane.f32.xlu0 %v430
      %v432 = vpop.xlane.xlu0 %431
      %v433 = vsel %vm297, %v214, -inf
      %434 = vmax.xlane.f32.xlu0 %v433
      %v435 = vpop.xlane.xlu0 %434
      %v436 = vsel %vm297, %v215, -inf
      %437 = vmax.xlane.f32.xlu0 %v436
      %v438 = vpop.xlane.xlu0 %437
      %v439 = vsel %vm297, %v216, -inf
      %440 = vmax.xlane.f32.xlu0 %v439
      %v441 = vpop.xlane.xlu0 %440
      %v442 = vsel %vm297, %v217, -inf
      %443 = vmax.xlane.f32.xlu0 %v442
      %v444 = vpop.xlane.xlu0 %443
      %v445 = vsel %vm297, %v218, -inf
      %446 = vmax.xlane.f32.xlu0 %v445
      %v447 = vpop.xlane.xlu0 %446
      %v448 = vsel %vm297, %v219, -inf
      %449 = vmax.xlane.f32.xlu0 %v448
      %v450 = vpop.xlane.xlu0 %449
      %v451 = vsel %vm297, %v220, -inf
      %452 = vmax.xlane.f32.xlu0 %v451
      %v453 = vpop.xlane.xlu0 %452
      %v454 = vsel %vm297, %v221, -inf
      %455 = vmax.xlane.f32.xlu0 %v454
      %v456 = vpop.xlane.xlu0 %455
      %v457 = vsel %vm297, %v222, -inf
      %458 = vmax.xlane.f32.xlu0 %v457
      %v459 = vpop.xlane.xlu0 %458
      %v460 = vsel %vm297, %v223, -inf
      %461 = vmax.xlane.f32.xlu0 %v460
      %v462 = vpop.xlane.xlu0 %461
      %v463 = vsel %vm297, %v224, -inf
      %464 = vmax.xlane.f32.xlu0 %v463
      %v465 = vpop.xlane.xlu0 %464
      %v466 = vsel %vm297, %v225, -inf
      %467 = vmax.xlane.f32.xlu0 %v466
      %v468 = vpop.xlane.xlu0 %467
      %v469 = vsel %vm297, %v226, -inf
      %470 = vmax.xlane.f32.xlu0 %v469
      %v471 = vpop.xlane.xlu0 %470
      %v472 = vsel %vm297, %v227, -inf
      %473 = vmax.xlane.f32.xlu0 %v472
      %v474 = vpop.xlane.xlu0 %473
      %v475 = vsel %vm297, %v228, -inf
      %476 = vmax.xlane.f32.xlu0 %v475
      %v477 = vpop.xlane.xlu0 %476
      %v478 = vsel %vm297, %v229, -inf
      %479 = vmax.xlane.f32.xlu0 %v478
      %v480 = vpop.xlane.xlu0 %479
      %v481 = vsel %vm297, %v230, -inf
      %482 = vmax.xlane.f32.xlu0 %v481
      %v483 = vpop.xlane.xlu0 %482
      %v484 = vsel %vm297, %v231, -inf
      %485 = vmax.xlane.f32.xlu0 %v484
      %v486 = vpop.xlane.xlu0 %485
      %v487 = vsel %vm297, %v232, -inf
      %488 = vmax.xlane.f32.xlu0 %v487
      %v489 = vpop.xlane.xlu0 %488
      %v490 = vsub.f32 %v169, %v300
      %v491 = vsub.f32 %v170, %v303
      %v492 = vsub.f32 %v171, %v306
      %v493 = vsub.f32 %v172, %v309
      %v494 = vsub.f32 %v173, %v312
      %v495 = vsub.f32 %v174, %v315
      %v496 = vsub.f32 %v175, %v318
      %v497 = vsub.f32 %v176, %v321
      %v498 = vsub.f32 %v177, %v324
      %v499 = vsub.f32 %v178, %v327
      %v500 = vsub.f32 %v179, %v330
      %v501 = vsub.f32 %v180, %v333
      %v502 = vsub.f32 %v181, %v336
      %v503 = vsub.f32 %v182, %v339
      %v504 = vsub.f32 %v183, %v342
      %v505 = vsub.f32 %v184, %v345
      %v506 = vsub.f32 %v185, %v348
      %v507 = vsub.f32 %v186, %v351
      %v508 = vsub.f32 %v187, %v354
      %v509 = vsub.f32 %v188, %v357
      %v510 = vsub.f32 %v189, %v360
      %v511 = vsub.f32 %v190, %v363
      %v512 = vsub.f32 %v191, %v366
      %v513 = vsub.f32 %v192, %v369
      %v514 = vsub.f32 %v193, %v372
      %v515 = vsub.f32 %v194, %v375
      %v516 = vsub.f32 %v195, %v378
      %v517 = vsub.f32 %v196, %v381
      %v518 = vsub.f32 %v197, %v384
      %v519 = vsub.f32 %v198, %v387
      %v520 = vsub.f32 %v199, %v390
      %v521 = vsub.f32 %v200, %v393
      %v522 = vsub.f32 %v201, %v396
      %v523 = vsub.f32 %v202, %v399
      %v524 = vsub.f32 %v203, %v402
      %v525 = vsub.f32 %v204, %v405
      %v526 = vsub.f32 %v205, %v408
      %v527 = vsub.f32 %v206, %v411
      %v528 = vsub.f32 %v207, %v414
      %v529 = vsub.f32 %v208, %v417
      %v530 = vsub.f32 %v209, %v420
      %v531 = vsub.f32 %v210, %v423
      %v532 = vsub.f32 %v211, %v426
      %v533 = vsub.f32 %v212, %v429
      %v534 = vsub.f32 %v213, %v432
      %v535 = vsub.f32 %v214, %v435
      %v536 = vsub.f32 %v215, %v438
      %v537 = vsub.f32 %v216, %v441
      %v538 = vsub.f32 %v217, %v444
      %v539 = vsub.f32 %v218, %v447
      %v540 = vsub.f32 %v219, %v450
      %v541 = vsub.f32 %v220, %v453
      %v542 = vsub.f32 %v221, %v456
      %v543 = vsub.f32 %v222, %v459
      %v544 = vsub.f32 %v223, %v462
      %v545 = vsub.f32 %v224, %v465
      %v546 = vsub.f32 %v225, %v468
      %v547 = vsub.f32 %v226, %v471
      %v548 = vsub.f32 %v227, %v474
      %v549 = vsub.f32 %v228, %v477
      %v550 = vsub.f32 %v229, %v480
      %v551 = vsub.f32 %v230, %v483
      %v552 = vsub.f32 %v231, %v486
      %v553 = vsub.f32 %v232, %v489
      %v554 = vmul.f32 %v490, 1.442695
      %v555 = vpow.pop %v554
      %v556 = vmul.f32 %v491, 1.442695
      %v557 = vpow.pop %v556
      %v558 = vmul.f32 %v492, 1.442695
      %v559 = vpow.pop %v558
      %v560 = vmul.f32 %v493, 1.442695
      %v561 = vpow.pop %v560
      %v562 = vmul.f32 %v494, 1.442695
      %v563 = vpow.pop %v562
      %v564 = vmul.f32 %v495, 1.442695
      %v565 = vpow.pop %v564
      %v566 = vmul.f32 %v496, 1.442695
      %v567 = vpow.pop %v566
      %v568 = vmul.f32 %v497, 1.442695
      %v569 = vpow.pop %v568
      %v570 = vmul.f32 %v498, 1.442695
      %v571 = vpow.pop %v570
      %v572 = vmul.f32 %v499, 1.442695
      %v573 = vpow.pop %v572
      %v574 = vmul.f32 %v500, 1.442695
      %v575 = vpow.pop %v574
      %v576 = vmul.f32 %v501, 1.442695
      %v577 = vpow.pop %v576
      %v578 = vmul.f32 %v502, 1.442695
      %v579 = vpow.pop %v578
      %v580 = vmul.f32 %v503, 1.442695
      %v581 = vpow.pop %v580
      %v582 = vmul.f32 %v504, 1.442695
      %v583 = vpow.pop %v582
      %v584 = vmul.f32 %v505, 1.442695
      %v585 = vpow.pop %v584
      %v586 = vmul.f32 %v506, 1.442695
      %v587 = vpow.pop %v586
      %v588 = vmul.f32 %v507, 1.442695
      %v589 = vpow.pop %v588
      %v590 = vmul.f32 %v508, 1.442695
      %v591 = vpow.pop %v590
      %v592 = vmul.f32 %v509, 1.442695
      %v593 = vpow.pop %v592
      %v594 = vmul.f32 %v510, 1.442695
      %v595 = vpow.pop %v594
      %v596 = vmul.f32 %v511, 1.442695
      %v597 = vpow.pop %v596
      %v598 = vmul.f32 %v512, 1.442695
      %v599 = vpow.pop %v598
      %v600 = vmul.f32 %v513, 1.442695
      %v601 = vpow.pop %v600
      %v602 = vmul.f32 %v514, 1.442695
      %v603 = vpow.pop %v602
      %v604 = vmul.f32 %v515, 1.442695
      %v605 = vpow.pop %v604
      %v606 = vmul.f32 %v516, 1.442695
      %v607 = vpow.pop %v606
      %v608 = vmul.f32 %v517, 1.442695
      %v609 = vpow.pop %v608
      %v610 = vmul.f32 %v518, 1.442695
      %v611 = vpow.pop %v610
      %v612 = vmul.f32 %v519, 1.442695
      %v613 = vpow.pop %v612
      %v614 = vmul.f32 %v520, 1.442695
      %v615 = vpow.pop %v614
      %v616 = vmul.f32 %v521, 1.442695
      %v617 = vpow.pop %v616
      %v618 = vmul.f32 %v522, 1.442695
      %v619 = vpow.pop %v618
      %v620 = vmul.f32 %v523, 1.442695
      %v621 = vpow.pop %v620
      %v622 = vmul.f32 %v524, 1.442695
      %v623 = vpow.pop %v622
      %v624 = vmul.f32 %v525, 1.442695
      %v625 = vpow.pop %v624
      %v626 = vmul.f32 %v526, 1.442695
      %v627 = vpow.pop %v626
      %v628 = vmul.f32 %v527, 1.442695
      %v629 = vpow.pop %v628
      %v630 = vmul.f32 %v528, 1.442695
      %v631 = vpow.pop %v630
      %v632 = vmul.f32 %v529, 1.442695
      %v633 = vpow.pop %v632
      %v634 = vmul.f32 %v530, 1.442695
      %v635 = vpow.pop %v634
      %v636 = vmul.f32 %v531, 1.442695
      %v637 = vpow.pop %v636
      %v638 = vmul.f32 %v532, 1.442695
      %v639 = vpow.pop %v638
      %v640 = vmul.f32 %v533, 1.442695
      %v641 = vpow.pop %v640
      %v642 = vmul.f32 %v534, 1.442695
      %v643 = vpow.pop %v642
      %v644 = vmul.f32 %v535, 1.442695
      %v645 = vpow.pop %v644
      %v646 = vmul.f32 %v536, 1.442695
      %v647 = vpow.pop %v646
      %v648 = vmul.f32 %v537, 1.442695
      %v649 = vpow.pop %v648
      %v650 = vmul.f32 %v538, 1.442695
      %v651 = vpow.pop %v650
      %v652 = vmul.f32 %v539, 1.442695
      %v653 = vpow.pop %v652
      %v654 = vmul.f32 %v540, 1.442695
      %v655 = vpow.pop %v654
      %v656 = vmul.f32 %v541, 1.442695
      %v657 = vpow.pop %v656
      %v658 = vmul.f32 %v542, 1.442695
      %v659 = vpow.pop %v658
      %v660 = vmul.f32 %v543, 1.442695
      %v661 = vpow.pop %v660
      %v662 = vmul.f32 %v544, 1.442695
      %v663 = vpow.pop %v662
      %v664 = vmul.f32 %v545, 1.442695
      %v665 = vpow.pop %v664
      %v666 = vmul.f32 %v546, 1.442695
      %v667 = vpow.pop %v666
      %v668 = vmul.f32 %v547, 1.442695
      %v669 = vpow.pop %v668
      %v670 = vmul.f32 %v548, 1.442695
      %v671 = vpow.pop %v670
      %v672 = vmul.f32 %v549, 1.442695
      %v673 = vpow.pop %v672
      %v674 = vmul.f32 %v550, 1.442695
      %v675 = vpow.pop %v674
      %v676 = vmul.f32 %v551, 1.442695
      %v677 = vpow.pop %v676
      %v678 = vmul.f32 %v552, 1.442695
      %v679 = vpow.pop %v678
      %v680 = vmul.f32 %v553, 1.442695
      %v681 = vpow.pop %v680
      %v682 = vsel %vm297, %v555, 0.0
      %683 = vadd.xlane.f32.xlu0 %v682
      %v684 = vpop.xlane.xlu0 %683
      %v685 = vsel %vm297, %v557, 0.0
      %686 = vadd.xlane.f32.xlu0 %v685
      %v687 = vpop.xlane.xlu0 %686
      %v688 = vsel %vm297, %v559, 0.0
      %689 = vadd.xlane.f32.xlu0 %v688
      %v690 = vpop.xlane.xlu0 %689
      %v691 = vsel %vm297, %v561, 0.0
      %692 = vadd.xlane.f32.xlu0 %v691
      %v693 = vpop.xlane.xlu0 %692
      %v694 = vsel %vm297, %v563, 0.0
      %695 = vadd.xlane.f32.xlu0 %v694
      %v696 = vpop.xlane.xlu0 %695
      %v697 = vsel %vm297, %v565, 0.0
      %698 = vadd.xlane.f32.xlu0 %v697
      %v699 = vpop.xlane.xlu0 %698
      %v700 = vsel %vm297, %v567, 0.0
      %701 = vadd.xlane.f32.xlu0 %v700
      %v702 = vpop.xlane.xlu0 %701
      %v703 = vsel %vm297, %v569, 0.0
      %704 = vadd.xlane.f32.xlu0 %v703
      %v705 = vpop.xlane.xlu0 %704
      %v706 = vsel %vm297, %v571, 0.0
      %707 = vadd.xlane.f32.xlu0 %v706
      %v708 = vpop.xlane.xlu0 %707
      %v709 = vsel %vm297, %v573, 0.0
      %710 = vadd.xlane.f32.xlu0 %v709
      %v711 = vpop.xlane.xlu0 %710
      %v712 = vsel %vm297, %v575, 0.0
      %713 = vadd.xlane.f32.xlu0 %v712
      %v714 = vpop.xlane.xlu0 %713
      %v715 = vsel %vm297, %v577, 0.0
      %716 = vadd.xlane.f32.xlu0 %v715
      %v717 = vpop.xlane.xlu0 %716
      %v718 = vsel %vm297, %v579, 0.0
      %719 = vadd.xlane.f32.xlu0 %v718
      %v720 = vpop.xlane.xlu0 %719
      %v721 = vsel %vm297, %v581, 0.0
      %722 = vadd.xlane.f32.xlu0 %v721
      %v723 = vpop.xlane.xlu0 %722
      %v724 = vsel %vm297, %v583, 0.0
      %725 = vadd.xlane.f32.xlu0 %v724
      %v726 = vpop.xlane.xlu0 %725
      %v727 = vsel %vm297, %v585, 0.0
      %728 = vadd.xlane.f32.xlu0 %v727
      %v729 = vpop.xlane.xlu0 %728
      %v730 = vsel %vm297, %v587, 0.0
      %731 = vadd.xlane.f32.xlu0 %v730
      %v732 = vpop.xlane.xlu0 %731
      %v733 = vsel %vm297, %v589, 0.0
      %734 = vadd.xlane.f32.xlu0 %v733
      %v735 = vpop.xlane.xlu0 %734
      %v736 = vsel %vm297, %v591, 0.0
      %737 = vadd.xlane.f32.xlu0 %v736
      %v738 = vpop.xlane.xlu0 %737
      %v739 = vsel %vm297, %v593, 0.0
      %740 = vadd.xlane.f32.xlu0 %v739
      %v741 = vpop.xlane.xlu0 %740
      %v742 = vsel %vm297, %v595, 0.0
      %743 = vadd.xlane.f32.xlu0 %v742
      %v744 = vpop.xlane.xlu0 %743
      %v745 = vsel %vm297, %v597, 0.0
      %746 = vadd.xlane.f32.xlu0 %v745
      %v747 = vpop.xlane.xlu0 %746
      %v748 = vsel %vm297, %v599, 0.0
      %749 = vadd.xlane.f32.xlu0 %v748
      %v750 = vpop.xlane.xlu0 %749
      %v751 = vsel %vm297, %v601, 0.0
      %752 = vadd.xlane.f32.xlu0 %v751
      %v753 = vpop.xlane.xlu0 %752
      %v754 = vsel %vm297, %v603, 0.0
      %755 = vadd.xlane.f32.xlu0 %v754
      %v756 = vpop.xlane.xlu0 %755
      %v757 = vsel %vm297, %v605, 0.0
      %758 = vadd.xlane.f32.xlu0 %v757
      %v759 = vpop.xlane.xlu0 %758
      %v760 = vsel %vm297, %v607, 0.0
      %761 = vadd.xlane.f32.xlu0 %v760
      %v762 = vpop.xlane.xlu0 %761
      %v763 = vsel %vm297, %v609, 0.0
      %764 = vadd.xlane.f32.xlu0 %v763
      %v765 = vpop.xlane.xlu0 %764
      %v766 = vsel %vm297, %v611, 0.0
      %767 = vadd.xlane.f32.xlu0 %v766
      %v768 = vpop.xlane.xlu0 %767
      %v769 = vsel %vm297, %v613, 0.0
      %770 = vadd.xlane.f32.xlu0 %v769
      %v771 = vpop.xlane.xlu0 %770
      %v772 = vsel %vm297, %v615, 0.0
      %773 = vadd.xlane.f32.xlu0 %v772
      %v774 = vpop.xlane.xlu0 %773
      %v775 = vsel %vm297, %v617, 0.0
      %776 = vadd.xlane.f32.xlu0 %v775
      %v777 = vpop.xlane.xlu0 %776
      %v778 = vsel %vm297, %v619, 0.0
      %779 = vadd.xlane.f32.xlu0 %v778
      %v780 = vpop.xlane.xlu0 %779
      %v781 = vsel %vm297, %v621, 0.0
      %782 = vadd.xlane.f32.xlu0 %v781
      %v783 = vpop.xlane.xlu0 %782
      %v784 = vsel %vm297, %v623, 0.0
      %785 = vadd.xlane.f32.xlu0 %v784
      %v786 = vpop.xlane.xlu0 %785
      %v787 = vsel %vm297, %v625, 0.0
      %788 = vadd.xlane.f32.xlu0 %v787
      %v789 = vpop.xlane.xlu0 %788
      %v790 = vsel %vm297, %v627, 0.0
      %791 = vadd.xlane.f32.xlu0 %v790
      %v792 = vpop.xlane.xlu0 %791
      %v793 = vsel %vm297, %v629, 0.0
      %794 = vadd.xlane.f32.xlu0 %v793
      %v795 = vpop.xlane.xlu0 %794
      %v796 = vsel %vm297, %v631, 0.0
      %797 = vadd.xlane.f32.xlu0 %v796
      %v798 = vpop.xlane.xlu0 %797
      %v799 = vsel %vm297, %v633, 0.0
      %800 = vadd.xlane.f32.xlu0 %v799
      %v801 = vpop.xlane.xlu0 %800
      %v802 = vsel %vm297, %v635, 0.0
      %803 = vadd.xlane.f32.xlu0 %v802
      %v804 = vpop.xlane.xlu0 %803
      %v805 = vsel %vm297, %v637, 0.0
      %806 = vadd.xlane.f32.xlu0 %v805
      %v807 = vpop.xlane.xlu0 %806
      %v808 = vsel %vm297, %v639, 0.0
      %809 = vadd.xlane.f32.xlu0 %v808
      %v810 = vpop.xlane.xlu0 %809
      %v811 = vsel %vm297, %v641, 0.0
      %812 = vadd.xlane.f32.xlu0 %v811
      %v813 = vpop.xlane.xlu0 %812
      %v814 = vsel %vm297, %v643, 0.0
      %815 = vadd.xlane.f32.xlu0 %v814
      %v816 = vpop.xlane.xlu0 %815
      %v817 = vsel %vm297, %v645, 0.0
      %818 = vadd.xlane.f32.xlu0 %v817
      %v819 = vpop.xlane.xlu0 %818
      %v820 = vsel %vm297, %v647, 0.0
      %821 = vadd.xlane.f32.xlu0 %v820
      %v822 = vpop.xlane.xlu0 %821
      %v823 = vsel %vm297, %v649, 0.0
      %824 = vadd.xlane.f32.xlu0 %v823
      %v825 = vpop.xlane.xlu0 %824
      %v826 = vsel %vm297, %v651, 0.0
      %827 = vadd.xlane.f32.xlu0 %v826
      %v828 = vpop.xlane.xlu0 %827
      %v829 = vsel %vm297, %v653, 0.0
      %830 = vadd.xlane.f32.xlu0 %v829
      %v831 = vpop.xlane.xlu0 %830
      %v832 = vsel %vm297, %v655, 0.0
      %833 = vadd.xlane.f32.xlu0 %v832
      %v834 = vpop.xlane.xlu0 %833
      %v835 = vsel %vm297, %v657, 0.0
      %836 = vadd.xlane.f32.xlu0 %v835
      %v837 = vpop.xlane.xlu0 %836
      %v838 = vsel %vm297, %v659, 0.0
      %839 = vadd.xlane.f32.xlu0 %v838
      %v840 = vpop.xlane.xlu0 %839
      %v841 = vsel %vm297, %v661, 0.0
      %842 = vadd.xlane.f32.xlu0 %v841
      %v843 = vpop.xlane.xlu0 %842
      %v844 = vsel %vm297, %v663, 0.0
      %845 = vadd.xlane.f32.xlu0 %v844
      %v846 = vpop.xlane.xlu0 %845
      %v847 = vsel %vm297, %v665, 0.0
      %848 = vadd.xlane.f32.xlu0 %v847
      %v849 = vpop.xlane.xlu0 %848
      %v850 = vsel %vm297, %v667, 0.0
      %851 = vadd.xlane.f32.xlu0 %v850
      %v852 = vpop.xlane.xlu0 %851
      %v853 = vsel %vm297, %v669, 0.0
      %854 = vadd.xlane.f32.xlu0 %v853
      %v855 = vpop.xlane.xlu0 %854
      %v856 = vsel %vm297, %v671, 0.0
      %857 = vadd.xlane.f32.xlu0 %v856
      %v858 = vpop.xlane.xlu0 %857
      %v859 = vsel %vm297, %v673, 0.0
      %860 = vadd.xlane.f32.xlu0 %v859
      %v861 = vpop.xlane.xlu0 %860
      %v862 = vsel %vm297, %v675, 0.0
      %863 = vadd.xlane.f32.xlu0 %v862
      %v864 = vpop.xlane.xlu0 %863
      %v865 = vsel %vm297, %v677, 0.0
      %866 = vadd.xlane.f32.xlu0 %v865
      %v867 = vpop.xlane.xlu0 %866
      %v868 = vsel %vm297, %v679, 0.0
      %869 = vadd.xlane.f32.xlu0 %v868
      %v870 = vpop.xlane.xlu0 %869
      %v871 = vsel %vm297, %v681, 0.0
      %872 = vadd.xlane.f32.xlu0 %v871
      %v873 = vpop.xlane.xlu0 %872
      %v874 = vmul.f32 %v555, %v490
      %v875 = vmul.f32 %v557, %v491
      %v876 = vmul.f32 %v559, %v492
      %v877 = vmul.f32 %v561, %v493
      %v878 = vmul.f32 %v563, %v494
      %v879 = vmul.f32 %v565, %v495
      %v880 = vmul.f32 %v567, %v496
      %v881 = vmul.f32 %v569, %v497
      %v882 = vmul.f32 %v571, %v498
      %v883 = vmul.f32 %v573, %v499
      %v884 = vmul.f32 %v575, %v500
      %v885 = vmul.f32 %v577, %v501
      %v886 = vmul.f32 %v579, %v502
      %v887 = vmul.f32 %v581, %v503
      %v888 = vmul.f32 %v583, %v504
      %v889 = vmul.f32 %v585, %v505
      %v890 = vmul.f32 %v587, %v506
      %v891 = vmul.f32 %v589, %v507
      %v892 = vmul.f32 %v591, %v508
      %v893 = vmul.f32 %v593, %v509
      %v894 = vmul.f32 %v595, %v510
      %v895 = vmul.f32 %v597, %v511
      %v896 = vmul.f32 %v599, %v512
      %v897 = vmul.f32 %v601, %v513
      %v898 = vmul.f32 %v603, %v514
      %v899 = vmul.f32 %v605, %v515
      %v900 = vmul.f32 %v607, %v516
      %v901 = vmul.f32 %v609, %v517
      %v902 = vmul.f32 %v611, %v518
      %v903 = vmul.f32 %v613, %v519
      %v904 = vmul.f32 %v615, %v520
      %v905 = vmul.f32 %v617, %v521
      %v906 = vmul.f32 %v619, %v522
      %v907 = vmul.f32 %v621, %v523
      %v908 = vmul.f32 %v623, %v524
      %v909 = vmul.f32 %v625, %v525
      %v910 = vmul.f32 %v627, %v526
      %v911 = vmul.f32 %v629, %v527
      %v912 = vmul.f32 %v631, %v528
      %v913 = vmul.f32 %v633, %v529
      %v914 = vmul.f32 %v635, %v530
      %v915 = vmul.f32 %v637, %v531
      %v916 = vmul.f32 %v639, %v532
      %v917 = vmul.f32 %v641, %v533
      %v918 = vmul.f32 %v643, %v534
      %v919 = vmul.f32 %v645, %v535
      %v920 = vmul.f32 %v647, %v536
      %v921 = vmul.f32 %v649, %v537
      %v922 = vmul.f32 %v651, %v538
      %v923 = vmul.f32 %v653, %v539
      %v924 = vmul.f32 %v655, %v540
      %v925 = vmul.f32 %v657, %v541
      %v926 = vmul.f32 %v659, %v542
      %v927 = vmul.f32 %v661, %v543
      %v928 = vmul.f32 %v663, %v544
      %v929 = vmul.f32 %v665, %v545
      %v930 = vmul.f32 %v667, %v546
      %v931 = vmul.f32 %v669, %v547
      %v932 = vmul.f32 %v671, %v548
      %v933 = vmul.f32 %v673, %v549
      %v934 = vmul.f32 %v675, %v550
      %v935 = vmul.f32 %v677, %v551
      %v936 = vmul.f32 %v679, %v552
      %v937 = vmul.f32 %v681, %v553
      %v938 = vsel %vm297, %v874, 0.0
      %939 = vadd.xlane.f32.xlu0 %v938
      %v940 = vpop.xlane.xlu0 %939
      %v941 = vsel %vm297, %v875, 0.0
      %942 = vadd.xlane.f32.xlu0 %v941
      %v943 = vpop.xlane.xlu0 %942
      %v944 = vsel %vm297, %v876, 0.0
      %945 = vadd.xlane.f32.xlu0 %v944
      %v946 = vpop.xlane.xlu0 %945
      %v947 = vsel %vm297, %v877, 0.0
      %948 = vadd.xlane.f32.xlu0 %v947
      %v949 = vpop.xlane.xlu0 %948
      %v950 = vsel %vm297, %v878, 0.0
      %951 = vadd.xlane.f32.xlu0 %v950
      %v952 = vpop.xlane.xlu0 %951
      %v953 = vsel %vm297, %v879, 0.0
      %954 = vadd.xlane.f32.xlu0 %v953
      %v955 = vpop.xlane.xlu0 %954
      %v956 = vsel %vm297, %v880, 0.0
      %957 = vadd.xlane.f32.xlu0 %v956
      %v958 = vpop.xlane.xlu0 %957
      %v959 = vsel %vm297, %v881, 0.0
      %960 = vadd.xlane.f32.xlu0 %v959
      %v961 = vpop.xlane.xlu0 %960
      %v962 = vsel %vm297, %v882, 0.0
      %963 = vadd.xlane.f32.xlu0 %v962
      %v964 = vpop.xlane.xlu0 %963
      %v965 = vsel %vm297, %v883, 0.0
      %966 = vadd.xlane.f32.xlu0 %v965
      %v967 = vpop.xlane.xlu0 %966
      %v968 = vsel %vm297, %v884, 0.0
      %969 = vadd.xlane.f32.xlu0 %v968
      %v970 = vpop.xlane.xlu0 %969
      %v971 = vsel %vm297, %v885, 0.0
      %972 = vadd.xlane.f32.xlu0 %v971
      %v973 = vpop.xlane.xlu0 %972
      %v974 = vsel %vm297, %v886, 0.0
      %975 = vadd.xlane.f32.xlu0 %v974
      %v976 = vpop.xlane.xlu0 %975
      %v977 = vsel %vm297, %v887, 0.0
      %978 = vadd.xlane.f32.xlu0 %v977
      %v979 = vpop.xlane.xlu0 %978
      %v980 = vsel %vm297, %v888, 0.0
      %981 = vadd.xlane.f32.xlu0 %v980
      %v982 = vpop.xlane.xlu0 %981
      %v983 = vsel %vm297, %v889, 0.0
      %984 = vadd.xlane.f32.xlu0 %v983
      %v985 = vpop.xlane.xlu0 %984
      %v986 = vsel %vm297, %v890, 0.0
      %987 = vadd.xlane.f32.xlu0 %v986
      %v988 = vpop.xlane.xlu0 %987
      %v989 = vsel %vm297, %v891, 0.0
      %990 = vadd.xlane.f32.xlu0 %v989
      %v991 = vpop.xlane.xlu0 %990
      %v992 = vsel %vm297, %v892, 0.0
      %993 = vadd.xlane.f32.xlu0 %v992
      %v994 = vpop.xlane.xlu0 %993
      %v995 = vsel %vm297, %v893, 0.0
      %996 = vadd.xlane.f32.xlu0 %v995
      %v997 = vpop.xlane.xlu0 %996
      %v998 = vsel %vm297, %v894, 0.0
      %999 = vadd.xlane.f32.xlu0 %v998
      %v1000 = vpop.xlane.xlu0 %999
      %v1001 = vsel %vm297, %v895, 0.0
      %1002 = vadd.xlane.f32.xlu0 %v1001
      %v1003 = vpop.xlane.xlu0 %1002
      %v1004 = vsel %vm297, %v896, 0.0
      %1005 = vadd.xlane.f32.xlu0 %v1004
      %v1006 = vpop.xlane.xlu0 %1005
      %v1007 = vsel %vm297, %v897, 0.0
      %1008 = vadd.xlane.f32.xlu0 %v1007
      %v1009 = vpop.xlane.xlu0 %1008
      %v1010 = vsel %vm297, %v898, 0.0
      %1011 = vadd.xlane.f32.xlu0 %v1010
      %v1012 = vpop.xlane.xlu0 %1011
      %v1013 = vsel %vm297, %v899, 0.0
      %1014 = vadd.xlane.f32.xlu0 %v1013
      %v1015 = vpop.xlane.xlu0 %1014
      %v1016 = vsel %vm297, %v900, 0.0
      %1017 = vadd.xlane.f32.xlu0 %v1016
      %v1018 = vpop.xlane.xlu0 %1017
      %v1019 = vsel %vm297, %v901, 0.0
      %1020 = vadd.xlane.f32.xlu0 %v1019
      %v1021 = vpop.xlane.xlu0 %1020
      %v1022 = vsel %vm297, %v902, 0.0
      %1023 = vadd.xlane.f32.xlu0 %v1022
      %v1024 = vpop.xlane.xlu0 %1023
      %v1025 = vsel %vm297, %v903, 0.0
      %1026 = vadd.xlane.f32.xlu0 %v1025
      %v1027 = vpop.xlane.xlu0 %1026
      %v1028 = vsel %vm297, %v904, 0.0
      %1029 = vadd.xlane.f32.xlu0 %v1028
      %v1030 = vpop.xlane.xlu0 %1029
      %v1031 = vsel %vm297, %v905, 0.0
      %1032 = vadd.xlane.f32.xlu0 %v1031
      %v1033 = vpop.xlane.xlu0 %1032
      %v1034 = vsel %vm297, %v906, 0.0
      %1035 = vadd.xlane.f32.xlu0 %v1034
      %v1036 = vpop.xlane.xlu0 %1035
      %v1037 = vsel %vm297, %v907, 0.0
      %1038 = vadd.xlane.f32.xlu0 %v1037
      %v1039 = vpop.xlane.xlu0 %1038
      %v1040 = vsel %vm297, %v908, 0.0
      %1041 = vadd.xlane.f32.xlu0 %v1040
      %v1042 = vpop.xlane.xlu0 %1041
      %v1043 = vsel %vm297, %v909, 0.0
      %1044 = vadd.xlane.f32.xlu0 %v1043
      %v1045 = vpop.xlane.xlu0 %1044
      %v1046 = vsel %vm297, %v910, 0.0
      %1047 = vadd.xlane.f32.xlu0 %v1046
      %v1048 = vpop.xlane.xlu0 %1047
      %v1049 = vsel %vm297, %v911, 0.0
      %1050 = vadd.xlane.f32.xlu0 %v1049
      %v1051 = vpop.xlane.xlu0 %1050
      %v1052 = vsel %vm297, %v912, 0.0
      %1053 = vadd.xlane.f32.xlu0 %v1052
      %v1054 = vpop.xlane.xlu0 %1053
      %v1055 = vsel %vm297, %v913, 0.0
      %1056 = vadd.xlane.f32.xlu0 %v1055
      %v1057 = vpop.xlane.xlu0 %1056
      %v1058 = vsel %vm297, %v914, 0.0
      %1059 = vadd.xlane.f32.xlu0 %v1058
      %v1060 = vpop.xlane.xlu0 %1059
      %v1061 = vsel %vm297, %v915, 0.0
      %1062 = vadd.xlane.f32.xlu0 %v1061
      %v1063 = vpop.xlane.xlu0 %1062
      %v1064 = vsel %vm297, %v916, 0.0
      %1065 = vadd.xlane.f32.xlu0 %v1064
      %v1066 = vpop.xlane.xlu0 %1065
      %v1067 = vsel %vm297, %v917, 0.0
      %1068 = vadd.xlane.f32.xlu0 %v1067
      %v1069 = vpop.xlane.xlu0 %1068
      %v1070 = vsel %vm297, %v918, 0.0
      %1071 = vadd.xlane.f32.xlu0 %v1070
      %v1072 = vpop.xlane.xlu0 %1071
      %v1073 = vsel %vm297, %v919, 0.0
      %1074 = vadd.xlane.f32.xlu0 %v1073
      %v1075 = vpop.xlane.xlu0 %1074
      %v1076 = vsel %vm297, %v920, 0.0
      %1077 = vadd.xlane.f32.xlu0 %v1076
      %v1078 = vpop.xlane.xlu0 %1077
      %v1079 = vsel %vm297, %v921, 0.0
      %1080 = vadd.xlane.f32.xlu0 %v1079
      %v1081 = vpop.xlane.xlu0 %1080
      %v1082 = vsel %vm297, %v922, 0.0
      %1083 = vadd.xlane.f32.xlu0 %v1082
      %v1084 = vpop.xlane.xlu0 %1083
      %v1085 = vsel %vm297, %v923, 0.0
      %1086 = vadd.xlane.f32.xlu0 %v1085
      %v1087 = vpop.xlane.xlu0 %1086
      %v1088 = vsel %vm297, %v924, 0.0
      %1089 = vadd.xlane.f32.xlu0 %v1088
      %v1090 = vpop.xlane.xlu0 %1089
      %v1091 = vsel %vm297, %v925, 0.0
      %1092 = vadd.xlane.f32.xlu0 %v1091
      %v1093 = vpop.xlane.xlu0 %1092
      %v1094 = vsel %vm297, %v926, 0.0
      %1095 = vadd.xlane.f32.xlu0 %v1094
      %v1096 = vpop.xlane.xlu0 %1095
      %v1097 = vsel %vm297, %v927, 0.0
      %1098 = vadd.xlane.f32.xlu0 %v1097
      %v1099 = vpop.xlane.xlu0 %1098
      %v1100 = vsel %vm297, %v928, 0.0
      %1101 = vadd.xlane.f32.xlu0 %v1100
      %v1102 = vpop.xlane.xlu0 %1101
      %v1103 = vsel %vm297, %v929, 0.0
      %1104 = vadd.xlane.f32.xlu0 %v1103
      %v1105 = vpop.xlane.xlu0 %1104
      %v1106 = vsel %vm297, %v930, 0.0
      %1107 = vadd.xlane.f32.xlu0 %v1106
      %v1108 = vpop.xlane.xlu0 %1107
      %v1109 = vsel %vm297, %v931, 0.0
      %1110 = vadd.xlane.f32.xlu0 %v1109
      %v1111 = vpop.xlane.xlu0 %1110
      %v1112 = vsel %vm297, %v932, 0.0
      %1113 = vadd.xlane.f32.xlu0 %v1112
      %v1114 = vpop.xlane.xlu0 %1113
      %v1115 = vsel %vm297, %v933, 0.0
      %1116 = vadd.xlane.f32.xlu0 %v1115
      %v1117 = vpop.xlane.xlu0 %1116
      %v1118 = vsel %vm297, %v934, 0.0
      %1119 = vadd.xlane.f32.xlu0 %v1118
      %v1120 = vpop.xlane.xlu0 %1119
      %v1121 = vsel %vm297, %v935, 0.0
      %1122 = vadd.xlane.f32.xlu0 %v1121
      %v1123 = vpop.xlane.xlu0 %1122
      %v1124 = vsel %vm297, %v936, 0.0
      %1125 = vadd.xlane.f32.xlu0 %v1124
      %v1126 = vpop.xlane.xlu0 %1125
      %v1127 = vsel %vm297, %v937, 0.0
      %1128 = vadd.xlane.f32.xlu0 %v1127
      %v1129 = vpop.xlane.xlu0 %1128
      %v1130 = vlog2.pop %v684
      %v1131 = vmul.f32 %v1130, 0.6931472
      %v1132 = vlog2.pop %v687
      %v1133 = vmul.f32 %v1132, 0.6931472
      %v1134 = vlog2.pop %v690
      %v1135 = vmul.f32 %v1134, 0.6931472
      %v1136 = vlog2.pop %v693
      %v1137 = vmul.f32 %v1136, 0.6931472
      %v1138 = vlog2.pop %v696
      %v1139 = vmul.f32 %v1138, 0.6931472
      %v1140 = vlog2.pop %v699
      %v1141 = vmul.f32 %v1140, 0.6931472
      %v1142 = vlog2.pop %v702
      %v1143 = vmul.f32 %v1142, 0.6931472
      %v1144 = vlog2.pop %v705
      %v1145 = vmul.f32 %v1144, 0.6931472
      %v1146 = vlog2.pop %v708
      %v1147 = vmul.f32 %v1146, 0.6931472
      %v1148 = vlog2.pop %v711
      %v1149 = vmul.f32 %v1148, 0.6931472
      %v1150 = vlog2.pop %v714
      %v1151 = vmul.f32 %v1150, 0.6931472
      %v1152 = vlog2.pop %v717
      %v1153 = vmul.f32 %v1152, 0.6931472
      %v1154 = vlog2.pop %v720
      %v1155 = vmul.f32 %v1154, 0.6931472
      %v1156 = vlog2.pop %v723
      %v1157 = vmul.f32 %v1156, 0.6931472
      %v1158 = vlog2.pop %v726
      %v1159 = vmul.f32 %v1158, 0.6931472
      %v1160 = vlog2.pop %v729
      %v1161 = vmul.f32 %v1160, 0.6931472
      %v1162 = vlog2.pop %v732
      %v1163 = vmul.f32 %v1162, 0.6931472
      %v1164 = vlog2.pop %v735
      %v1165 = vmul.f32 %v1164, 0.6931472
      %v1166 = vlog2.pop %v738
      %v1167 = vmul.f32 %v1166, 0.6931472
      %v1168 = vlog2.pop %v741
      %v1169 = vmul.f32 %v1168, 0.6931472
      %v1170 = vlog2.pop %v744
      %v1171 = vmul.f32 %v1170, 0.6931472
      %v1172 = vlog2.pop %v747
      %v1173 = vmul.f32 %v1172, 0.6931472
      %v1174 = vlog2.pop %v750
      %v1175 = vmul.f32 %v1174, 0.6931472
      %v1176 = vlog2.pop %v753
      %v1177 = vmul.f32 %v1176, 0.6931472
      %v1178 = vlog2.pop %v756
      %v1179 = vmul.f32 %v1178, 0.6931472
      %v1180 = vlog2.pop %v759
      %v1181 = vmul.f32 %v1180, 0.6931472
      %v1182 = vlog2.pop %v762
      %v1183 = vmul.f32 %v1182, 0.6931472
      %v1184 = vlog2.pop %v765
      %v1185 = vmul.f32 %v1184, 0.6931472
      %v1186 = vlog2.pop %v768
      %v1187 = vmul.f32 %v1186, 0.6931472
      %v1188 = vlog2.pop %v771
      %v1189 = vmul.f32 %v1188, 0.6931472
      %v1190 = vlog2.pop %v774
      %v1191 = vmul.f32 %v1190, 0.6931472
      %v1192 = vlog2.pop %v777
      %v1193 = vmul.f32 %v1192, 0.6931472
      %v1194 = vlog2.pop %v780
      %v1195 = vmul.f32 %v1194, 0.6931472
      %v1196 = vlog2.pop %v783
      %v1197 = vmul.f32 %v1196, 0.6931472
      %v1198 = vlog2.pop %v786
      %v1199 = vmul.f32 %v1198, 0.6931472
      %v1200 = vlog2.pop %v789
      %v1201 = vmul.f32 %v1200, 0.6931472
      %v1202 = vlog2.pop %v792
      %v1203 = vmul.f32 %v1202, 0.6931472
      %v1204 = vlog2.pop %v795
      %v1205 = vmul.f32 %v1204, 0.6931472
      %v1206 = vlog2.pop %v798
      %v1207 = vmul.f32 %v1206, 0.6931472
      %v1208 = vlog2.pop %v801
      %v1209 = vmul.f32 %v1208, 0.6931472
      %v1210 = vlog2.pop %v804
      %v1211 = vmul.f32 %v1210, 0.6931472
      %v1212 = vlog2.pop %v807
      %v1213 = vmul.f32 %v1212, 0.6931472
      %v1214 = vlog2.pop %v810
      %v1215 = vmul.f32 %v1214, 0.6931472
      %v1216 = vlog2.pop %v813
      %v1217 = vmul.f32 %v1216, 0.6931472
      %v1218 = vlog2.pop %v816
      %v1219 = vmul.f32 %v1218, 0.6931472
      %v1220 = vlog2.pop %v819
      %v1221 = vmul.f32 %v1220, 0.6931472
      %v1222 = vlog2.pop %v822
      %v1223 = vmul.f32 %v1222, 0.6931472
      %v1224 = vlog2.pop %v825
      %v1225 = vmul.f32 %v1224, 0.6931472
      %v1226 = vlog2.pop %v828
      %v1227 = vmul.f32 %v1226, 0.6931472
      %v1228 = vlog2.pop %v831
      %v1229 = vmul.f32 %v1228, 0.6931472
      %v1230 = vlog2.pop %v834
      %v1231 = vmul.f32 %v1230, 0.6931472
      %v1232 = vlog2.pop %v837
      %v1233 = vmul.f32 %v1232, 0.6931472
      %v1234 = vlog2.pop %v840
      %v1235 = vmul.f32 %v1234, 0.6931472
      %v1236 = vlog2.pop %v843
      %v1237 = vmul.f32 %v1236, 0.6931472
      %v1238 = vlog2.pop %v846
      %v1239 = vmul.f32 %v1238, 0.6931472
      %v1240 = vlog2.pop %v849
      %v1241 = vmul.f32 %v1240, 0.6931472
      %v1242 = vlog2.pop %v852
      %v1243 = vmul.f32 %v1242, 0.6931472
      %v1244 = vlog2.pop %v855
      %v1245 = vmul.f32 %v1244, 0.6931472
      %v1246 = vlog2.pop %v858
      %v1247 = vmul.f32 %v1246, 0.6931472
      %v1248 = vlog2.pop %v861
      %v1249 = vmul.f32 %v1248, 0.6931472
      %v1250 = vlog2.pop %v864
      %v1251 = vmul.f32 %v1250, 0.6931472
      %v1252 = vlog2.pop %v867
      %v1253 = vmul.f32 %v1252, 0.6931472
      %v1254 = vlog2.pop %v870
      %v1255 = vmul.f32 %v1254, 0.6931472
      %v1256 = vlog2.pop %v873
      %v1257 = vmul.f32 %v1256, 0.6931472
      %v1258 = vrcp.pop %v684
      %v1259 = vrcp.pop %v687
      %v1260 = vrcp.pop %v690
      %v1261 = vrcp.pop %v693
      %v1262 = vrcp.pop %v696
      %v1263 = vrcp.pop %v699
      %v1264 = vrcp.pop %v702
      %v1265 = vrcp.pop %v705
      %v1266 = vrcp.pop %v708
      %v1267 = vrcp.pop %v711
      %v1268 = vrcp.pop %v714
      %v1269 = vrcp.pop %v717
      %v1270 = vrcp.pop %v720
      %v1271 = vrcp.pop %v723
      %v1272 = vrcp.pop %v726
      %v1273 = vrcp.pop %v729
      %v1274 = vrcp.pop %v732
      %v1275 = vrcp.pop %v735
      %v1276 = vrcp.pop %v738
      %v1277 = vrcp.pop %v741
      %v1278 = vrcp.pop %v744
      %v1279 = vrcp.pop %v747
      %v1280 = vrcp.pop %v750
      %v1281 = vrcp.pop %v753
      %v1282 = vrcp.pop %v756
      %v1283 = vrcp.pop %v759
      %v1284 = vrcp.pop %v762
      %v1285 = vrcp.pop %v765
      %v1286 = vrcp.pop %v768
      %v1287 = vrcp.pop %v771
      %v1288 = vrcp.pop %v774
      %v1289 = vrcp.pop %v777
      %v1290 = vrcp.pop %v780
      %v1291 = vrcp.pop %v783
      %v1292 = vrcp.pop %v786
      %v1293 = vrcp.pop %v789
      %v1294 = vrcp.pop %v792
      %v1295 = vrcp.pop %v795
      %v1296 = vrcp.pop %v798
      %v1297 = vrcp.pop %v801
      %v1298 = vrcp.pop %v804
      %v1299 = vrcp.pop %v807
      %v1300 = vrcp.pop %v810
      %v1301 = vrcp.pop %v813
      %v1302 = vrcp.pop %v816
      %v1303 = vrcp.pop %v819
      %v1304 = vrcp.pop %v822
      %v1305 = vrcp.pop %v825
      %v1306 = vrcp.pop %v828
      %v1307 = vrcp.pop %v831
      %v1308 = vrcp.pop %v834
      %v1309 = vrcp.pop %v837
      %v1310 = vrcp.pop %v840
      %v1311 = vrcp.pop %v843
      %v1312 = vrcp.pop %v846
      %v1313 = vrcp.pop %v849
      %v1314 = vrcp.pop %v852
      %v1315 = vrcp.pop %v855
      %v1316 = vrcp.pop %v858
      %v1317 = vrcp.pop %v861
      %v1318 = vrcp.pop %v864
      %v1319 = vrcp.pop %v867
      %v1320 = vrcp.pop %v870
      %v1321 = vrcp.pop %v873
      %v1322 = vmul.f32 %v940, %v1258
      %v1323 = vmul.f32 %v943, %v1259
      %v1324 = vmul.f32 %v946, %v1260
      %v1325 = vmul.f32 %v949, %v1261
      %v1326 = vmul.f32 %v952, %v1262
      %v1327 = vmul.f32 %v955, %v1263
      %v1328 = vmul.f32 %v958, %v1264
      %v1329 = vmul.f32 %v961, %v1265
      %v1330 = vmul.f32 %v964, %v1266
      %v1331 = vmul.f32 %v967, %v1267
      %v1332 = vmul.f32 %v970, %v1268
      %v1333 = vmul.f32 %v973, %v1269
      %v1334 = vmul.f32 %v976, %v1270
      %v1335 = vmul.f32 %v979, %v1271
      %v1336 = vmul.f32 %v982, %v1272
      %v1337 = vmul.f32 %v985, %v1273
      %v1338 = vmul.f32 %v988, %v1274
      %v1339 = vmul.f32 %v991, %v1275
      %v1340 = vmul.f32 %v994, %v1276
      %v1341 = vmul.f32 %v997, %v1277
      %v1342 = vmul.f32 %v1000, %v1278
      %v1343 = vmul.f32 %v1003, %v1279
      %v1344 = vmul.f32 %v1006, %v1280
      %v1345 = vmul.f32 %v1009, %v1281
      %v1346 = vmul.f32 %v1012, %v1282
      %v1347 = vmul.f32 %v1015, %v1283
      %v1348 = vmul.f32 %v1018, %v1284
      %v1349 = vmul.f32 %v1021, %v1285
      %v1350 = vmul.f32 %v1024, %v1286
      %v1351 = vmul.f32 %v1027, %v1287
      %v1352 = vmul.f32 %v1030, %v1288
      %v1353 = vmul.f32 %v1033, %v1289
      %v1354 = vmul.f32 %v1036, %v1290
      %v1355 = vmul.f32 %v1039, %v1291
      %v1356 = vmul.f32 %v1042, %v1292
      %v1357 = vmul.f32 %v1045, %v1293
      %v1358 = vmul.f32 %v1048, %v1294
      %v1359 = vmul.f32 %v1051, %v1295
      %v1360 = vmul.f32 %v1054, %v1296
      %v1361 = vmul.f32 %v1057, %v1297
      %v1362 = vmul.f32 %v1060, %v1298
      %v1363 = vmul.f32 %v1063, %v1299
      %v1364 = vmul.f32 %v1066, %v1300
      %v1365 = vmul.f32 %v1069, %v1301
      %v1366 = vmul.f32 %v1072, %v1302
      %v1367 = vmul.f32 %v1075, %v1303
      %v1368 = vmul.f32 %v1078, %v1304
      %v1369 = vmul.f32 %v1081, %v1305
      %v1370 = vmul.f32 %v1084, %v1306
      %v1371 = vmul.f32 %v1087, %v1307
      %v1372 = vmul.f32 %v1090, %v1308
      %v1373 = vmul.f32 %v1093, %v1309
      %v1374 = vmul.f32 %v1096, %v1310
      %v1375 = vmul.f32 %v1099, %v1311
      %v1376 = vmul.f32 %v1102, %v1312
      %v1377 = vmul.f32 %v1105, %v1313
      %v1378 = vmul.f32 %v1108, %v1314
      %v1379 = vmul.f32 %v1111, %v1315
      %v1380 = vmul.f32 %v1114, %v1316
      %v1381 = vmul.f32 %v1117, %v1317
      %v1382 = vmul.f32 %v1120, %v1318
      %v1383 = vmul.f32 %v1123, %v1319
      %v1384 = vmul.f32 %v1126, %v1320
      %v1385 = vmul.f32 %v1129, %v1321
      %v1386 = vsub.f32 %v1131, %v1322
      %v1387 = vsub.f32 %v1133, %v1323
      %v1388 = vsub.f32 %v1135, %v1324
      %v1389 = vsub.f32 %v1137, %v1325
      %v1390 = vsub.f32 %v1139, %v1326
      %v1391 = vsub.f32 %v1141, %v1327
      %v1392 = vsub.f32 %v1143, %v1328
      %v1393 = vsub.f32 %v1145, %v1329
      %v1394 = vsub.f32 %v1147, %v1330
      %v1395 = vsub.f32 %v1149, %v1331
      %v1396 = vsub.f32 %v1151, %v1332
      %v1397 = vsub.f32 %v1153, %v1333
      %v1398 = vsub.f32 %v1155, %v1334
      %v1399 = vsub.f32 %v1157, %v1335
      %v1400 = vsub.f32 %v1159, %v1336
      %v1401 = vsub.f32 %v1161, %v1337
      %v1402 = vsub.f32 %v1163, %v1338
      %v1403 = vsub.f32 %v1165, %v1339
      %v1404 = vsub.f32 %v1167, %v1340
      %v1405 = vsub.f32 %v1169, %v1341
      %v1406 = vsub.f32 %v1171, %v1342
      %v1407 = vsub.f32 %v1173, %v1343
      %v1408 = vsub.f32 %v1175, %v1344
      %v1409 = vsub.f32 %v1177, %v1345
      %v1410 = vsub.f32 %v1179, %v1346
      %v1411 = vsub.f32 %v1181, %v1347
      %v1412 = vsub.f32 %v1183, %v1348
      %v1413 = vsub.f32 %v1185, %v1349
      %v1414 = vsub.f32 %v1187, %v1350
      %v1415 = vsub.f32 %v1189, %v1351
      %v1416 = vsub.f32 %v1191, %v1352
      %v1417 = vsub.f32 %v1193, %v1353
      %v1418 = vsub.f32 %v1195, %v1354
      %v1419 = vsub.f32 %v1197, %v1355
      %v1420 = vsub.f32 %v1199, %v1356
      %v1421 = vsub.f32 %v1201, %v1357
      %v1422 = vsub.f32 %v1203, %v1358
      %v1423 = vsub.f32 %v1205, %v1359
      %v1424 = vsub.f32 %v1207, %v1360
      %v1425 = vsub.f32 %v1209, %v1361
      %v1426 = vsub.f32 %v1211, %v1362
      %v1427 = vsub.f32 %v1213, %v1363
      %v1428 = vsub.f32 %v1215, %v1364
      %v1429 = vsub.f32 %v1217, %v1365
      %v1430 = vsub.f32 %v1219, %v1366
      %v1431 = vsub.f32 %v1221, %v1367
      %v1432 = vsub.f32 %v1223, %v1368
      %v1433 = vsub.f32 %v1225, %v1369
      %v1434 = vsub.f32 %v1227, %v1370
      %v1435 = vsub.f32 %v1229, %v1371
      %v1436 = vsub.f32 %v1231, %v1372
      %v1437 = vsub.f32 %v1233, %v1373
      %v1438 = vsub.f32 %v1235, %v1374
      %v1439 = vsub.f32 %v1237, %v1375
      %v1440 = vsub.f32 %v1239, %v1376
      %v1441 = vsub.f32 %v1241, %v1377
      %v1442 = vsub.f32 %v1243, %v1378
      %v1443 = vsub.f32 %v1245, %v1379
      %v1444 = vsub.f32 %v1247, %v1380
      %v1445 = vsub.f32 %v1249, %v1381
      %v1446 = vsub.f32 %v1251, %v1382
      %v1447 = vsub.f32 %v1253, %v1383
      %v1448 = vsub.f32 %v1255, %v1384
      %v1449 = vsub.f32 %v1257, %v1385
      %v1450 = vlaneseq
      %v1451 = vand.u32 %v1450, 127
      %1452 = vset.pattern.permute.xlu0 0
      %1453 = vperm.xlu0 %1452, %v233
      %v1454 = vpop.permute.xlu0 %1453
      %1455 = vset.pattern.permute.xlu0 0
      %1456 = vperm.xlu0 %1455, %v234
      %v1457 = vpop.permute.xlu0 %1456
      %1458 = vset.pattern.permute.xlu0 0
      %1459 = vperm.xlu0 %1458, %v235
      %v1460 = vpop.permute.xlu0 %1459
      %1461 = vset.pattern.permute.xlu0 0
      %1462 = vperm.xlu0 %1461, %v236
      %v1463 = vpop.permute.xlu0 %1462
      %1464 = vset.pattern.permute.xlu0 0
      %1465 = vperm.xlu0 %1464, %v237
      %v1466 = vpop.permute.xlu0 %1465
      %1467 = vset.pattern.permute.xlu0 0
      %1468 = vperm.xlu0 %1467, %v238
      %v1469 = vpop.permute.xlu0 %1468
      %1470 = vset.pattern.permute.xlu0 0
      %1471 = vperm.xlu0 %1470, %v239
      %v1472 = vpop.permute.xlu0 %1471
      %1473 = vset.pattern.permute.xlu0 0
      %1474 = vperm.xlu0 %1473, %v240
      %v1475 = vpop.permute.xlu0 %1474
      %1476 = vset.pattern.permute.xlu0 0
      %1477 = vperm.xlu0 %1476, %v241
      %v1478 = vpop.permute.xlu0 %1477
      %1479 = vset.pattern.permute.xlu0 0
      %1480 = vperm.xlu0 %1479, %v242
      %v1481 = vpop.permute.xlu0 %1480
      %1482 = vset.pattern.permute.xlu0 0
      %1483 = vperm.xlu0 %1482, %v243
      %v1484 = vpop.permute.xlu0 %1483
      %1485 = vset.pattern.permute.xlu0 0
      %1486 = vperm.xlu0 %1485, %v244
      %v1487 = vpop.permute.xlu0 %1486
      %1488 = vset.pattern.permute.xlu0 0
      %1489 = vperm.xlu0 %1488, %v245
      %v1490 = vpop.permute.xlu0 %1489
      %1491 = vset.pattern.permute.xlu0 0
      %1492 = vperm.xlu0 %1491, %v246
      %v1493 = vpop.permute.xlu0 %1492
      %1494 = vset.pattern.permute.xlu0 0
      %1495 = vperm.xlu0 %1494, %v247
      %v1496 = vpop.permute.xlu0 %1495
      %1497 = vset.pattern.permute.xlu0 0
      %1498 = vperm.xlu0 %1497, %v248
      %v1499 = vpop.permute.xlu0 %1498
      %1500 = vset.pattern.permute.xlu0 0
      %1501 = vperm.xlu0 %1500, %v249
      %v1502 = vpop.permute.xlu0 %1501
      %1503 = vset.pattern.permute.xlu0 0
      %1504 = vperm.xlu0 %1503, %v250
      %v1505 = vpop.permute.xlu0 %1504
      %1506 = vset.pattern.permute.xlu0 0
      %1507 = vperm.xlu0 %1506, %v251
      %v1508 = vpop.permute.xlu0 %1507
      %1509 = vset.pattern.permute.xlu0 0
      %1510 = vperm.xlu0 %1509, %v252
      %v1511 = vpop.permute.xlu0 %1510
      %1512 = vset.pattern.permute.xlu0 0
      %1513 = vperm.xlu0 %1512, %v253
      %v1514 = vpop.permute.xlu0 %1513
      %1515 = vset.pattern.permute.xlu0 0
      %1516 = vperm.xlu0 %1515, %v254
      %v1517 = vpop.permute.xlu0 %1516
      %1518 = vset.pattern.permute.xlu0 0
      %1519 = vperm.xlu0 %1518, %v255
      %v1520 = vpop.permute.xlu0 %1519
      %1521 = vset.pattern.permute.xlu0 0
      %1522 = vperm.xlu0 %1521, %v256
      %v1523 = vpop.permute.xlu0 %1522
      %1524 = vset.pattern.permute.xlu0 0
      %1525 = vperm.xlu0 %1524, %v257
      %v1526 = vpop.permute.xlu0 %1525
      %1527 = vset.pattern.permute.xlu0 0
      %1528 = vperm.xlu0 %1527, %v258
      %v1529 = vpop.permute.xlu0 %1528
      %1530 = vset.pattern.permute.xlu0 0
      %1531 = vperm.xlu0 %1530, %v259
      %v1532 = vpop.permute.xlu0 %1531
      %1533 = vset.pattern.permute.xlu0 0
      %1534 = vperm.xlu0 %1533, %v260
      %v1535 = vpop.permute.xlu0 %1534
      %1536 = vset.pattern.permute.xlu0 0
      %1537 = vperm.xlu0 %1536, %v261
      %v1538 = vpop.permute.xlu0 %1537
      %1539 = vset.pattern.permute.xlu0 0
      %1540 = vperm.xlu0 %1539, %v262
      %v1541 = vpop.permute.xlu0 %1540
      %1542 = vset.pattern.permute.xlu0 0
      %1543 = vperm.xlu0 %1542, %v263
      %v1544 = vpop.permute.xlu0 %1543
      %1545 = vset.pattern.permute.xlu0 0
      %1546 = vperm.xlu0 %1545, %v264
      %v1547 = vpop.permute.xlu0 %1546
      %1548 = vset.pattern.permute.xlu0 0
      %1549 = vperm.xlu0 %1548, %v265
      %v1550 = vpop.permute.xlu0 %1549
      %1551 = vset.pattern.permute.xlu0 0
      %1552 = vperm.xlu0 %1551, %v266
      %v1553 = vpop.permute.xlu0 %1552
      %1554 = vset.pattern.permute.xlu0 0
      %1555 = vperm.xlu0 %1554, %v267
      %v1556 = vpop.permute.xlu0 %1555
      %1557 = vset.pattern.permute.xlu0 0
      %1558 = vperm.xlu0 %1557, %v268
      %v1559 = vpop.permute.xlu0 %1558
      %1560 = vset.pattern.permute.xlu0 0
      %1561 = vperm.xlu0 %1560, %v269
      %v1562 = vpop.permute.xlu0 %1561
      %1563 = vset.pattern.permute.xlu0 0
      %1564 = vperm.xlu0 %1563, %v270
      %v1565 = vpop.permute.xlu0 %1564
      %1566 = vset.pattern.permute.xlu0 0
      %1567 = vperm.xlu0 %1566, %v271
      %v1568 = vpop.permute.xlu0 %1567
      %1569 = vset.pattern.permute.xlu0 0
      %1570 = vperm.xlu0 %1569, %v272
      %v1571 = vpop.permute.xlu0 %1570
      %1572 = vset.pattern.permute.xlu0 0
      %1573 = vperm.xlu0 %1572, %v273
      %v1574 = vpop.permute.xlu0 %1573
      %1575 = vset.pattern.permute.xlu0 0
      %1576 = vperm.xlu0 %1575, %v274
      %v1577 = vpop.permute.xlu0 %1576
      %1578 = vset.pattern.permute.xlu0 0
      %1579 = vperm.xlu0 %1578, %v275
      %v1580 = vpop.permute.xlu0 %1579
      %1581 = vset.pattern.permute.xlu0 0
      %1582 = vperm.xlu0 %1581, %v276
      %v1583 = vpop.permute.xlu0 %1582
      %1584 = vset.pattern.permute.xlu0 0
      %1585 = vperm.xlu0 %1584, %v277
      %v1586 = vpop.permute.xlu0 %1585
      %1587 = vset.pattern.permute.xlu0 0
      %1588 = vperm.xlu0 %1587, %v278
      %v1589 = vpop.permute.xlu0 %1588
      %1590 = vset.pattern.permute.xlu0 0
      %1591 = vperm.xlu0 %1590, %v279
      %v1592 = vpop.permute.xlu0 %1591
      %1593 = vset.pattern.permute.xlu0 0
      %1594 = vperm.xlu0 %1593, %v280
      %v1595 = vpop.permute.xlu0 %1594
      %1596 = vset.pattern.permute.xlu0 0
      %1597 = vperm.xlu0 %1596, %v281
      %v1598 = vpop.permute.xlu0 %1597
      %1599 = vset.pattern.permute.xlu0 0
      %1600 = vperm.xlu0 %1599, %v282
      %v1601 = vpop.permute.xlu0 %1600
      %1602 = vset.pattern.permute.xlu0 0
      %1603 = vperm.xlu0 %1602, %v283
      %v1604 = vpop.permute.xlu0 %1603
      %1605 = vset.pattern.permute.xlu0 0
      %1606 = vperm.xlu0 %1605, %v284
      %v1607 = vpop.permute.xlu0 %1606
      %1608 = vset.pattern.permute.xlu0 0
      %1609 = vperm.xlu0 %1608, %v285
      %v1610 = vpop.permute.xlu0 %1609
      %1611 = vset.pattern.permute.xlu0 0
      %1612 = vperm.xlu0 %1611, %v286
      %v1613 = vpop.permute.xlu0 %1612
      %1614 = vset.pattern.permute.xlu0 0
      %1615 = vperm.xlu0 %1614, %v287
      %v1616 = vpop.permute.xlu0 %1615
      %1617 = vset.pattern.permute.xlu0 0
      %1618 = vperm.xlu0 %1617, %v288
      %v1619 = vpop.permute.xlu0 %1618
      %1620 = vset.pattern.permute.xlu0 0
      %1621 = vperm.xlu0 %1620, %v289
      %v1622 = vpop.permute.xlu0 %1621
      %1623 = vset.pattern.permute.xlu0 0
      %1624 = vperm.xlu0 %1623, %v290
      %v1625 = vpop.permute.xlu0 %1624
      %1626 = vset.pattern.permute.xlu0 0
      %1627 = vperm.xlu0 %1626, %v291
      %v1628 = vpop.permute.xlu0 %1627
      %1629 = vset.pattern.permute.xlu0 0
      %1630 = vperm.xlu0 %1629, %v292
      %v1631 = vpop.permute.xlu0 %1630
      %1632 = vset.pattern.permute.xlu0 0
      %1633 = vperm.xlu0 %1632, %v293
      %v1634 = vpop.permute.xlu0 %1633
      %1635 = vset.pattern.permute.xlu0 0
      %1636 = vperm.xlu0 %1635, %v294
      %v1637 = vpop.permute.xlu0 %1636
      %1638 = vset.pattern.permute.xlu0 0
      %1639 = vperm.xlu0 %1638, %v295
      %v1640 = vpop.permute.xlu0 %1639
      %1641 = vset.pattern.permute.xlu0 0
      %1642 = vperm.xlu0 %1641, %v296
      %v1643 = vpop.permute.xlu0 %1642
      %vm1644 = vcmp.eq.s32.totalorder %v1451, %v1454
      %vm1645 = vcmp.eq.s32.totalorder %v1451, %v1457
      %vm1646 = vcmp.eq.s32.totalorder %v1451, %v1460
      %vm1647 = vcmp.eq.s32.totalorder %v1451, %v1463
      %vm1648 = vcmp.eq.s32.totalorder %v1451, %v1466
      %vm1649 = vcmp.eq.s32.totalorder %v1451, %v1469
      %vm1650 = vcmp.eq.s32.totalorder %v1451, %v1472
      %vm1651 = vcmp.eq.s32.totalorder %v1451, %v1475
      %vm1652 = vcmp.eq.s32.totalorder %v1451, %v1478
      %vm1653 = vcmp.eq.s32.totalorder %v1451, %v1481
      %vm1654 = vcmp.eq.s32.totalorder %v1451, %v1484
      %vm1655 = vcmp.eq.s32.totalorder %v1451, %v1487
      %vm1656 = vcmp.eq.s32.totalorder %v1451, %v1490
      %vm1657 = vcmp.eq.s32.totalorder %v1451, %v1493
      %vm1658 = vcmp.eq.s32.totalorder %v1451, %v1496
      %vm1659 = vcmp.eq.s32.totalorder %v1451, %v1499
      %vm1660 = vcmp.eq.s32.totalorder %v1451, %v1502
      %vm1661 = vcmp.eq.s32.totalorder %v1451, %v1505
      %vm1662 = vcmp.eq.s32.totalorder %v1451, %v1508
      %vm1663 = vcmp.eq.s32.totalorder %v1451, %v1511
      %vm1664 = vcmp.eq.s32.totalorder %v1451, %v1514
      %vm1665 = vcmp.eq.s32.totalorder %v1451, %v1517
      %vm1666 = vcmp.eq.s32.totalorder %v1451, %v1520
      %vm1667 = vcmp.eq.s32.totalorder %v1451, %v1523
      %vm1668 = vcmp.eq.s32.totalorder %v1451, %v1526
      %vm1669 = vcmp.eq.s32.totalorder %v1451, %v1529
      %vm1670 = vcmp.eq.s32.totalorder %v1451, %v1532
      %vm1671 = vcmp.eq.s32.totalorder %v1451, %v1535
      %vm1672 = vcmp.eq.s32.totalorder %v1451, %v1538
      %vm1673 = vcmp.eq.s32.totalorder %v1451, %v1541
      %vm1674 = vcmp.eq.s32.totalorder %v1451, %v1544
      %vm1675 = vcmp.eq.s32.totalorder %v1451, %v1547
      %vm1676 = vcmp.eq.s32.totalorder %v1451, %v1550
      %vm1677 = vcmp.eq.s32.totalorder %v1451, %v1553
      %vm1678 = vcmp.eq.s32.totalorder %v1451, %v1556
      %vm1679 = vcmp.eq.s32.totalorder %v1451, %v1559
      %vm1680 = vcmp.eq.s32.totalorder %v1451, %v1562
      %vm1681 = vcmp.eq.s32.totalorder %v1451, %v1565
      %vm1682 = vcmp.eq.s32.totalorder %v1451, %v1568
      %vm1683 = vcmp.eq.s32.totalorder %v1451, %v1571
      %vm1684 = vcmp.eq.s32.totalorder %v1451, %v1574
      %vm1685 = vcmp.eq.s32.totalorder %v1451, %v1577
      %vm1686 = vcmp.eq.s32.totalorder %v1451, %v1580
      %vm1687 = vcmp.eq.s32.totalorder %v1451, %v1583
      %vm1688 = vcmp.eq.s32.totalorder %v1451, %v1586
      %vm1689 = vcmp.eq.s32.totalorder %v1451, %v1589
      %vm1690 = vcmp.eq.s32.totalorder %v1451, %v1592
      %vm1691 = vcmp.eq.s32.totalorder %v1451, %v1595
      %vm1692 = vcmp.eq.s32.totalorder %v1451, %v1598
      %vm1693 = vcmp.eq.s32.totalorder %v1451, %v1601
      %vm1694 = vcmp.eq.s32.totalorder %v1451, %v1604
      %vm1695 = vcmp.eq.s32.totalorder %v1451, %v1607
      %vm1696 = vcmp.eq.s32.totalorder %v1451, %v1610
      %vm1697 = vcmp.eq.s32.totalorder %v1451, %v1613
      %vm1698 = vcmp.eq.s32.totalorder %v1451, %v1616
      %vm1699 = vcmp.eq.s32.totalorder %v1451, %v1619
      %vm1700 = vcmp.eq.s32.totalorder %v1451, %v1622
      %vm1701 = vcmp.eq.s32.totalorder %v1451, %v1625
      %vm1702 = vcmp.eq.s32.totalorder %v1451, %v1628
      %vm1703 = vcmp.eq.s32.totalorder %v1451, %v1631
      %vm1704 = vcmp.eq.s32.totalorder %v1451, %v1634
      %vm1705 = vcmp.eq.s32.totalorder %v1451, %v1637
      %vm1706 = vcmp.eq.s32.totalorder %v1451, %v1640
      %vm1707 = vcmp.eq.s32.totalorder %v1451, %v1643
      %v1708 = vsel %vm1644, 1, 0
      %v1709 = vsel %vm1645, 1, 0
      %v1710 = vsel %vm1646, 1, 0
      %v1711 = vsel %vm1647, 1, 0
      %v1712 = vsel %vm1648, 1, 0
      %v1713 = vsel %vm1649, 1, 0
      %v1714 = vsel %vm1650, 1, 0
      %v1715 = vsel %vm1651, 1, 0
      %v1716 = vsel %vm1652, 1, 0
      %v1717 = vsel %vm1653, 1, 0
      %v1718 = vsel %vm1654, 1, 0
      %v1719 = vsel %vm1655, 1, 0
      %v1720 = vsel %vm1656, 1, 0
      %v1721 = vsel %vm1657, 1, 0
      %v1722 = vsel %vm1658, 1, 0
      %v1723 = vsel %vm1659, 1, 0
      %v1724 = vsel %vm1660, 1, 0
      %v1725 = vsel %vm1661, 1, 0
      %v1726 = vsel %vm1662, 1, 0
      %v1727 = vsel %vm1663, 1, 0
      %v1728 = vsel %vm1664, 1, 0
      %v1729 = vsel %vm1665, 1, 0
      %v1730 = vsel %vm1666, 1, 0
      %v1731 = vsel %vm1667, 1, 0
      %v1732 = vsel %vm1668, 1, 0
      %v1733 = vsel %vm1669, 1, 0
      %v1734 = vsel %vm1670, 1, 0
      %v1735 = vsel %vm1671, 1, 0
      %v1736 = vsel %vm1672, 1, 0
      %v1737 = vsel %vm1673, 1, 0
      %v1738 = vsel %vm1674, 1, 0
      %v1739 = vsel %vm1675, 1, 0
      %v1740 = vsel %vm1676, 1, 0
      %v1741 = vsel %vm1677, 1, 0
      %v1742 = vsel %vm1678, 1, 0
      %v1743 = vsel %vm1679, 1, 0
      %v1744 = vsel %vm1680, 1, 0
      %v1745 = vsel %vm1681, 1, 0
      %v1746 = vsel %vm1682, 1, 0
      %v1747 = vsel %vm1683, 1, 0
      %v1748 = vsel %vm1684, 1, 0
      %v1749 = vsel %vm1685, 1, 0
      %v1750 = vsel %vm1686, 1, 0
      %v1751 = vsel %vm1687, 1, 0
      %v1752 = vsel %vm1688, 1, 0
      %v1753 = vsel %vm1689, 1, 0
      %v1754 = vsel %vm1690, 1, 0
      %v1755 = vsel %vm1691, 1, 0
      %v1756 = vsel %vm1692, 1, 0
      %v1757 = vsel %vm1693, 1, 0
      %v1758 = vsel %vm1694, 1, 0
      %v1759 = vsel %vm1695, 1, 0
      %v1760 = vsel %vm1696, 1, 0
      %v1761 = vsel %vm1697, 1, 0
      %v1762 = vsel %vm1698, 1, 0
      %v1763 = vsel %vm1699, 1, 0
      %v1764 = vsel %vm1700, 1, 0
      %v1765 = vsel %vm1701, 1, 0
      %v1766 = vsel %vm1702, 1, 0
      %v1767 = vsel %vm1703, 1, 0
      %v1768 = vsel %vm1704, 1, 0
      %v1769 = vsel %vm1705, 1, 0
      %v1770 = vsel %vm1706, 1, 0
      %v1771 = vsel %vm1707, 1, 0
      %v1772 = vcvt.s32.f32 %v1708
      %v1773 = vcvt.s32.f32 %v1709
      %v1774 = vcvt.s32.f32 %v1710
      %v1775 = vcvt.s32.f32 %v1711
      %v1776 = vcvt.s32.f32 %v1712
      %v1777 = vcvt.s32.f32 %v1713
      %v1778 = vcvt.s32.f32 %v1714
      %v1779 = vcvt.s32.f32 %v1715
      %v1780 = vcvt.s32.f32 %v1716
      %v1781 = vcvt.s32.f32 %v1717
      %v1782 = vcvt.s32.f32 %v1718
      %v1783 = vcvt.s32.f32 %v1719
      %v1784 = vcvt.s32.f32 %v1720
      %v1785 = vcvt.s32.f32 %v1721
      %v1786 = vcvt.s32.f32 %v1722
      %v1787 = vcvt.s32.f32 %v1723
      %v1788 = vcvt.s32.f32 %v1724
      %v1789 = vcvt.s32.f32 %v1725
      %v1790 = vcvt.s32.f32 %v1726
      %v1791 = vcvt.s32.f32 %v1727
      %v1792 = vcvt.s32.f32 %v1728
      %v1793 = vcvt.s32.f32 %v1729
      %v1794 = vcvt.s32.f32 %v1730
      %v1795 = vcvt.s32.f32 %v1731
      %v1796 = vcvt.s32.f32 %v1732
      %v1797 = vcvt.s32.f32 %v1733
      %v1798 = vcvt.s32.f32 %v1734
      %v1799 = vcvt.s32.f32 %v1735
      %v1800 = vcvt.s32.f32 %v1736
      %v1801 = vcvt.s32.f32 %v1737
      %v1802 = vcvt.s32.f32 %v1738
      %v1803 = vcvt.s32.f32 %v1739
      %v1804 = vcvt.s32.f32 %v1740
      %v1805 = vcvt.s32.f32 %v1741
      %v1806 = vcvt.s32.f32 %v1742
      %v1807 = vcvt.s32.f32 %v1743
      %v1808 = vcvt.s32.f32 %v1744
      %v1809 = vcvt.s32.f32 %v1745
      %v1810 = vcvt.s32.f32 %v1746
      %v1811 = vcvt.s32.f32 %v1747
      %v1812 = vcvt.s32.f32 %v1748
      %v1813 = vcvt.s32.f32 %v1749
      %v1814 = vcvt.s32.f32 %v1750
      %v1815 = vcvt.s32.f32 %v1751
      %v1816 = vcvt.s32.f32 %v1752
      %v1817 = vcvt.s32.f32 %v1753
      %v1818 = vcvt.s32.f32 %v1754
      %v1819 = vcvt.s32.f32 %v1755
      %v1820 = vcvt.s32.f32 %v1756
      %v1821 = vcvt.s32.f32 %v1757
      %v1822 = vcvt.s32.f32 %v1758
      %v1823 = vcvt.s32.f32 %v1759
      %v1824 = vcvt.s32.f32 %v1760
      %v1825 = vcvt.s32.f32 %v1761
      %v1826 = vcvt.s32.f32 %v1762
      %v1827 = vcvt.s32.f32 %v1763
      %v1828 = vcvt.s32.f32 %v1764
      %v1829 = vcvt.s32.f32 %v1765
      %v1830 = vcvt.s32.f32 %v1766
      %v1831 = vcvt.s32.f32 %v1767
      %v1832 = vcvt.s32.f32 %v1768
      %v1833 = vcvt.s32.f32 %v1769
      %v1834 = vcvt.s32.f32 %v1770
      %v1835 = vcvt.s32.f32 %v1771
      %v1836 = vmul.f32 %v1772, %v169
      %v1837 = vmul.f32 %v1773, %v170
      %v1838 = vmul.f32 %v1774, %v171
      %v1839 = vmul.f32 %v1775, %v172
      %v1840 = vmul.f32 %v1776, %v173
      %v1841 = vmul.f32 %v1777, %v174
      %v1842 = vmul.f32 %v1778, %v175
      %v1843 = vmul.f32 %v1779, %v176
      %v1844 = vmul.f32 %v1780, %v177
      %v1845 = vmul.f32 %v1781, %v178
      %v1846 = vmul.f32 %v1782, %v179
      %v1847 = vmul.f32 %v1783, %v180
      %v1848 = vmul.f32 %v1784, %v181
      %v1849 = vmul.f32 %v1785, %v182
      %v1850 = vmul.f32 %v1786, %v183
      %v1851 = vmul.f32 %v1787, %v184
      %v1852 = vmul.f32 %v1788, %v185
      %v1853 = vmul.f32 %v1789, %v186
      %v1854 = vmul.f32 %v1790, %v187
      %v1855 = vmul.f32 %v1791, %v188
      %v1856 = vmul.f32 %v1792, %v189
      %v1857 = vmul.f32 %v1793, %v190
      %v1858 = vmul.f32 %v1794, %v191
      %v1859 = vmul.f32 %v1795, %v192
      %v1860 = vmul.f32 %v1796, %v193
      %v1861 = vmul.f32 %v1797, %v194
      %v1862 = vmul.f32 %v1798, %v195
      %v1863 = vmul.f32 %v1799, %v196
      %v1864 = vmul.f32 %v1800, %v197
      %v1865 = vmul.f32 %v1801, %v198
      %v1866 = vmul.f32 %v1802, %v199
      %v1867 = vmul.f32 %v1803, %v200
      %v1868 = vmul.f32 %v1804, %v201
      %v1869 = vmul.f32 %v1805, %v202
      %v1870 = vmul.f32 %v1806, %v203
      %v1871 = vmul.f32 %v1807, %v204
      %v1872 = vmul.f32 %v1808, %v205
      %v1873 = vmul.f32 %v1809, %v206
      %v1874 = vmul.f32 %v1810, %v207
      %v1875 = vmul.f32 %v1811, %v208
      %v1876 = vmul.f32 %v1812, %v209
      %v1877 = vmul.f32 %v1813, %v210
      %v1878 = vmul.f32 %v1814, %v211
      %v1879 = vmul.f32 %v1815, %v212
      %v1880 = vmul.f32 %v1816, %v213
      %v1881 = vmul.f32 %v1817, %v214
      %v1882 = vmul.f32 %v1818, %v215
      %v1883 = vmul.f32 %v1819, %v216
      %v1884 = vmul.f32 %v1820, %v217
      %v1885 = vmul.f32 %v1821, %v218
      %v1886 = vmul.f32 %v1822, %v219
      %v1887 = vmul.f32 %v1823, %v220
      %v1888 = vmul.f32 %v1824, %v221
      %v1889 = vmul.f32 %v1825, %v222
      %v1890 = vmul.f32 %v1826, %v223
      %v1891 = vmul.f32 %v1827, %v224
      %v1892 = vmul.f32 %v1828, %v225
      %v1893 = vmul.f32 %v1829, %v226
      %v1894 = vmul.f32 %v1830, %v227
      %v1895 = vmul.f32 %v1831, %v228
      %v1896 = vmul.f32 %v1832, %v229
      %v1897 = vmul.f32 %v1833, %v230
      %v1898 = vmul.f32 %v1834, %v231
      %v1899 = vmul.f32 %v1835, %v232
      %v1900 = vsel %vm297, %v1836, 0.0
      %1901 = vadd.xlane.f32.xlu0 %v1900
      %v1902 = vpop.xlane.xlu0 %1901
      %v1903 = vsel %vm297, %v1837, 0.0
      %1904 = vadd.xlane.f32.xlu0 %v1903
      %v1905 = vpop.xlane.xlu0 %1904
      %v1906 = vsel %vm297, %v1838, 0.0
      %1907 = vadd.xlane.f32.xlu0 %v1906
      %v1908 = vpop.xlane.xlu0 %1907
      %v1909 = vsel %vm297, %v1839, 0.0
      %1910 = vadd.xlane.f32.xlu0 %v1909
      %v1911 = vpop.xlane.xlu0 %1910
      %v1912 = vsel %vm297, %v1840, 0.0
      %1913 = vadd.xlane.f32.xlu0 %v1912
      %v1914 = vpop.xlane.xlu0 %1913
      %v1915 = vsel %vm297, %v1841, 0.0
      %1916 = vadd.xlane.f32.xlu0 %v1915
      %v1917 = vpop.xlane.xlu0 %1916
      %v1918 = vsel %vm297, %v1842, 0.0
      %1919 = vadd.xlane.f32.xlu0 %v1918
      %v1920 = vpop.xlane.xlu0 %1919
      %v1921 = vsel %vm297, %v1843, 0.0
      %1922 = vadd.xlane.f32.xlu0 %v1921
      %v1923 = vpop.xlane.xlu0 %1922
      %v1924 = vsel %vm297, %v1844, 0.0
      %1925 = vadd.xlane.f32.xlu0 %v1924
      %v1926 = vpop.xlane.xlu0 %1925
      %v1927 = vsel %vm297, %v1845, 0.0
      %1928 = vadd.xlane.f32.xlu0 %v1927
      %v1929 = vpop.xlane.xlu0 %1928
      %v1930 = vsel %vm297, %v1846, 0.0
      %1931 = vadd.xlane.f32.xlu0 %v1930
      %v1932 = vpop.xlane.xlu0 %1931
      %v1933 = vsel %vm297, %v1847, 0.0
      %1934 = vadd.xlane.f32.xlu0 %v1933
      %v1935 = vpop.xlane.xlu0 %1934
      %v1936 = vsel %vm297, %v1848, 0.0
      %1937 = vadd.xlane.f32.xlu0 %v1936
      %v1938 = vpop.xlane.xlu0 %1937
      %v1939 = vsel %vm297, %v1849, 0.0
      %1940 = vadd.xlane.f32.xlu0 %v1939
      %v1941 = vpop.xlane.xlu0 %1940
      %v1942 = vsel %vm297, %v1850, 0.0
      %1943 = vadd.xlane.f32.xlu0 %v1942
      %v1944 = vpop.xlane.xlu0 %1943
      %v1945 = vsel %vm297, %v1851, 0.0
      %1946 = vadd.xlane.f32.xlu0 %v1945
      %v1947 = vpop.xlane.xlu0 %1946
      %v1948 = vsel %vm297, %v1852, 0.0
      %1949 = vadd.xlane.f32.xlu0 %v1948
      %v1950 = vpop.xlane.xlu0 %1949
      %v1951 = vsel %vm297, %v1853, 0.0
      %1952 = vadd.xlane.f32.xlu0 %v1951
      %v1953 = vpop.xlane.xlu0 %1952
      %v1954 = vsel %vm297, %v1854, 0.0
      %1955 = vadd.xlane.f32.xlu0 %v1954
      %v1956 = vpop.xlane.xlu0 %1955
      %v1957 = vsel %vm297, %v1855, 0.0
      %1958 = vadd.xlane.f32.xlu0 %v1957
      %v1959 = vpop.xlane.xlu0 %1958
      %v1960 = vsel %vm297, %v1856, 0.0
      %1961 = vadd.xlane.f32.xlu0 %v1960
      %v1962 = vpop.xlane.xlu0 %1961
      %v1963 = vsel %vm297, %v1857, 0.0
      %1964 = vadd.xlane.f32.xlu0 %v1963
      %v1965 = vpop.xlane.xlu0 %1964
      %v1966 = vsel %vm297, %v1858, 0.0
      %1967 = vadd.xlane.f32.xlu0 %v1966
      %v1968 = vpop.xlane.xlu0 %1967
      %v1969 = vsel %vm297, %v1859, 0.0
      %1970 = vadd.xlane.f32.xlu0 %v1969
      %v1971 = vpop.xlane.xlu0 %1970
      %v1972 = vsel %vm297, %v1860, 0.0
      %1973 = vadd.xlane.f32.xlu0 %v1972
      %v1974 = vpop.xlane.xlu0 %1973
      %v1975 = vsel %vm297, %v1861, 0.0
      %1976 = vadd.xlane.f32.xlu0 %v1975
      %v1977 = vpop.xlane.xlu0 %1976
      %v1978 = vsel %vm297, %v1862, 0.0
      %1979 = vadd.xlane.f32.xlu0 %v1978
      %v1980 = vpop.xlane.xlu0 %1979
      %v1981 = vsel %vm297, %v1863, 0.0
      %1982 = vadd.xlane.f32.xlu0 %v1981
      %v1983 = vpop.xlane.xlu0 %1982
      %v1984 = vsel %vm297, %v1864, 0.0
      %1985 = vadd.xlane.f32.xlu0 %v1984
      %v1986 = vpop.xlane.xlu0 %1985
      %v1987 = vsel %vm297, %v1865, 0.0
      %1988 = vadd.xlane.f32.xlu0 %v1987
      %v1989 = vpop.xlane.xlu0 %1988
      %v1990 = vsel %vm297, %v1866, 0.0
      %1991 = vadd.xlane.f32.xlu0 %v1990
      %v1992 = vpop.xlane.xlu0 %1991
      %v1993 = vsel %vm297, %v1867, 0.0
      %1994 = vadd.xlane.f32.xlu0 %v1993
      %v1995 = vpop.xlane.xlu0 %1994
      %v1996 = vsel %vm297, %v1868, 0.0
      %1997 = vadd.xlane.f32.xlu0 %v1996
      %v1998 = vpop.xlane.xlu0 %1997
      %v1999 = vsel %vm297, %v1869, 0.0
      %2000 = vadd.xlane.f32.xlu0 %v1999
      %v2001 = vpop.xlane.xlu0 %2000
      %v2002 = vsel %vm297, %v1870, 0.0
      %2003 = vadd.xlane.f32.xlu0 %v2002
      %v2004 = vpop.xlane.xlu0 %2003
      %v2005 = vsel %vm297, %v1871, 0.0
      %2006 = vadd.xlane.f32.xlu0 %v2005
      %v2007 = vpop.xlane.xlu0 %2006
      %v2008 = vsel %vm297, %v1872, 0.0
      %2009 = vadd.xlane.f32.xlu0 %v2008
      %v2010 = vpop.xlane.xlu0 %2009
      %v2011 = vsel %vm297, %v1873, 0.0
      %2012 = vadd.xlane.f32.xlu0 %v2011
      %v2013 = vpop.xlane.xlu0 %2012
      %v2014 = vsel %vm297, %v1874, 0.0
      %2015 = vadd.xlane.f32.xlu0 %v2014
      %v2016 = vpop.xlane.xlu0 %2015
      %v2017 = vsel %vm297, %v1875, 0.0
      %2018 = vadd.xlane.f32.xlu0 %v2017
      %v2019 = vpop.xlane.xlu0 %2018
      %v2020 = vsel %vm297, %v1876, 0.0
      %2021 = vadd.xlane.f32.xlu0 %v2020
      %v2022 = vpop.xlane.xlu0 %2021
      %v2023 = vsel %vm297, %v1877, 0.0
      %2024 = vadd.xlane.f32.xlu0 %v2023
      %v2025 = vpop.xlane.xlu0 %2024
      %v2026 = vsel %vm297, %v1878, 0.0
      %2027 = vadd.xlane.f32.xlu0 %v2026
      %v2028 = vpop.xlane.xlu0 %2027
      %v2029 = vsel %vm297, %v1879, 0.0
      %2030 = vadd.xlane.f32.xlu0 %v2029
      %v2031 = vpop.xlane.xlu0 %2030
      %v2032 = vsel %vm297, %v1880, 0.0
      %2033 = vadd.xlane.f32.xlu0 %v2032
      %v2034 = vpop.xlane.xlu0 %2033
      %v2035 = vsel %vm297, %v1881, 0.0
      %2036 = vadd.xlane.f32.xlu0 %v2035
      %v2037 = vpop.xlane.xlu0 %2036
      %v2038 = vsel %vm297, %v1882, 0.0
      %2039 = vadd.xlane.f32.xlu0 %v2038
      %v2040 = vpop.xlane.xlu0 %2039
      %v2041 = vsel %vm297, %v1883, 0.0
      %2042 = vadd.xlane.f32.xlu0 %v2041
      %v2043 = vpop.xlane.xlu0 %2042
      %v2044 = vsel %vm297, %v1884, 0.0
      %2045 = vadd.xlane.f32.xlu0 %v2044
      %v2046 = vpop.xlane.xlu0 %2045
      %v2047 = vsel %vm297, %v1885, 0.0
      %2048 = vadd.xlane.f32.xlu0 %v2047
      %v2049 = vpop.xlane.xlu0 %2048
      %v2050 = vsel %vm297, %v1886, 0.0
      %2051 = vadd.xlane.f32.xlu0 %v2050
      %v2052 = vpop.xlane.xlu0 %2051
      %v2053 = vsel %vm297, %v1887, 0.0
      %2054 = vadd.xlane.f32.xlu0 %v2053
      %v2055 = vpop.xlane.xlu0 %2054
      %v2056 = vsel %vm297, %v1888, 0.0
      %2057 = vadd.xlane.f32.xlu0 %v2056
      %v2058 = vpop.xlane.xlu0 %2057
      %v2059 = vsel %vm297, %v1889, 0.0
      %2060 = vadd.xlane.f32.xlu0 %v2059
      %v2061 = vpop.xlane.xlu0 %2060
      %v2062 = vsel %vm297, %v1890, 0.0
      %2063 = vadd.xlane.f32.xlu0 %v2062
      %v2064 = vpop.xlane.xlu0 %2063
      %v2065 = vsel %vm297, %v1891, 0.0
      %2066 = vadd.xlane.f32.xlu0 %v2065
      %v2067 = vpop.xlane.xlu0 %2066
      %v2068 = vsel %vm297, %v1892, 0.0
      %2069 = vadd.xlane.f32.xlu0 %v2068
      %v2070 = vpop.xlane.xlu0 %2069
      %v2071 = vsel %vm297, %v1893, 0.0
      %2072 = vadd.xlane.f32.xlu0 %v2071
      %v2073 = vpop.xlane.xlu0 %2072
      %v2074 = vsel %vm297, %v1894, 0.0
      %2075 = vadd.xlane.f32.xlu0 %v2074
      %v2076 = vpop.xlane.xlu0 %2075
      %v2077 = vsel %vm297, %v1895, 0.0
      %2078 = vadd.xlane.f32.xlu0 %v2077
      %v2079 = vpop.xlane.xlu0 %2078
      %v2080 = vsel %vm297, %v1896, 0.0
      %2081 = vadd.xlane.f32.xlu0 %v2080
      %v2082 = vpop.xlane.xlu0 %2081
      %v2083 = vsel %vm297, %v1897, 0.0
      %2084 = vadd.xlane.f32.xlu0 %v2083
      %v2085 = vpop.xlane.xlu0 %2084
      %v2086 = vsel %vm297, %v1898, 0.0
      %2087 = vadd.xlane.f32.xlu0 %v2086
      %v2088 = vpop.xlane.xlu0 %2087
      %v2089 = vsel %vm297, %v1899, 0.0
      %2090 = vadd.xlane.f32.xlu0 %v2089
      %v2091 = vpop.xlane.xlu0 %2090
      %v2092 = vadd.f32 %v300, %v1131
      %v2093 = vadd.f32 %v303, %v1133
      %v2094 = vadd.f32 %v306, %v1135
      %v2095 = vadd.f32 %v309, %v1137
      %v2096 = vadd.f32 %v312, %v1139
      %v2097 = vadd.f32 %v315, %v1141
      %v2098 = vadd.f32 %v318, %v1143
      %v2099 = vadd.f32 %v321, %v1145
      %v2100 = vadd.f32 %v324, %v1147
      %v2101 = vadd.f32 %v327, %v1149
      %v2102 = vadd.f32 %v330, %v1151
      %v2103 = vadd.f32 %v333, %v1153
      %v2104 = vadd.f32 %v336, %v1155
      %v2105 = vadd.f32 %v339, %v1157
      %v2106 = vadd.f32 %v342, %v1159
      %v2107 = vadd.f32 %v345, %v1161
      %v2108 = vadd.f32 %v348, %v1163
      %v2109 = vadd.f32 %v351, %v1165
      %v2110 = vadd.f32 %v354, %v1167
      %v2111 = vadd.f32 %v357, %v1169
      %v2112 = vadd.f32 %v360, %v1171
      %v2113 = vadd.f32 %v363, %v1173
      %v2114 = vadd.f32 %v366, %v1175
      %v2115 = vadd.f32 %v369, %v1177
      %v2116 = vadd.f32 %v372, %v1179
      %v2117 = vadd.f32 %v375, %v1181
      %v2118 = vadd.f32 %v378, %v1183
      %v2119 = vadd.f32 %v381, %v1185
      %v2120 = vadd.f32 %v384, %v1187
      %v2121 = vadd.f32 %v387, %v1189
      %v2122 = vadd.f32 %v390, %v1191
      %v2123 = vadd.f32 %v393, %v1193
      %v2124 = vadd.f32 %v396, %v1195
      %v2125 = vadd.f32 %v399, %v1197
      %v2126 = vadd.f32 %v402, %v1199
      %v2127 = vadd.f32 %v405, %v1201
      %v2128 = vadd.f32 %v408, %v1203
      %v2129 = vadd.f32 %v411, %v1205
      %v2130 = vadd.f32 %v414, %v1207
      %v2131 = vadd.f32 %v417, %v1209
      %v2132 = vadd.f32 %v420, %v1211
      %v2133 = vadd.f32 %v423, %v1213
      %v2134 = vadd.f32 %v426, %v1215
      %v2135 = vadd.f32 %v429, %v1217
      %v2136 = vadd.f32 %v432, %v1219
      %v2137 = vadd.f32 %v435, %v1221
      %v2138 = vadd.f32 %v438, %v1223
      %v2139 = vadd.f32 %v441, %v1225
      %v2140 = vadd.f32 %v444, %v1227
      %v2141 = vadd.f32 %v447, %v1229
      %v2142 = vadd.f32 %v450, %v1231
      %v2143 = vadd.f32 %v453, %v1233
      %v2144 = vadd.f32 %v456, %v1235
      %v2145 = vadd.f32 %v459, %v1237
      %v2146 = vadd.f32 %v462, %v1239
      %v2147 = vadd.f32 %v465, %v1241
      %v2148 = vadd.f32 %v468, %v1243
      %v2149 = vadd.f32 %v471, %v1245
      %v2150 = vadd.f32 %v474, %v1247
      %v2151 = vadd.f32 %v477, %v1249
      %v2152 = vadd.f32 %v480, %v1251
      %v2153 = vadd.f32 %v483, %v1253
      %v2154 = vadd.f32 %v486, %v1255
      %v2155 = vadd.f32 %v489, %v1257
      %v2156 = vsub.f32 %v1902, %v2092
      %v2157 = vsub.f32 %v1905, %v2093
      %v2158 = vsub.f32 %v1908, %v2094
      %v2159 = vsub.f32 %v1911, %v2095
      %v2160 = vsub.f32 %v1914, %v2096
      %v2161 = vsub.f32 %v1917, %v2097
      %v2162 = vsub.f32 %v1920, %v2098
      %v2163 = vsub.f32 %v1923, %v2099
      %v2164 = vsub.f32 %v1926, %v2100
      %v2165 = vsub.f32 %v1929, %v2101
      %v2166 = vsub.f32 %v1932, %v2102
      %v2167 = vsub.f32 %v1935, %v2103
      %v2168 = vsub.f32 %v1938, %v2104
      %v2169 = vsub.f32 %v1941, %v2105
      %v2170 = vsub.f32 %v1944, %v2106
      %v2171 = vsub.f32 %v1947, %v2107
      %v2172 = vsub.f32 %v1950, %v2108
      %v2173 = vsub.f32 %v1953, %v2109
      %v2174 = vsub.f32 %v1956, %v2110
      %v2175 = vsub.f32 %v1959, %v2111
      %v2176 = vsub.f32 %v1962, %v2112
      %v2177 = vsub.f32 %v1965, %v2113
      %v2178 = vsub.f32 %v1968, %v2114
      %v2179 = vsub.f32 %v1971, %v2115
      %v2180 = vsub.f32 %v1974, %v2116
      %v2181 = vsub.f32 %v1977, %v2117
      %v2182 = vsub.f32 %v1980, %v2118
      %v2183 = vsub.f32 %v1983, %v2119
      %v2184 = vsub.f32 %v1986, %v2120
      %v2185 = vsub.f32 %v1989, %v2121
      %v2186 = vsub.f32 %v1992, %v2122
      %v2187 = vsub.f32 %v1995, %v2123
      %v2188 = vsub.f32 %v1998, %v2124
      %v2189 = vsub.f32 %v2001, %v2125
      %v2190 = vsub.f32 %v2004, %v2126
      %v2191 = vsub.f32 %v2007, %v2127
      %v2192 = vsub.f32 %v2010, %v2128
      %v2193 = vsub.f32 %v2013, %v2129
      %v2194 = vsub.f32 %v2016, %v2130
      %v2195 = vsub.f32 %v2019, %v2131
      %v2196 = vsub.f32 %v2022, %v2132
      %v2197 = vsub.f32 %v2025, %v2133
      %v2198 = vsub.f32 %v2028, %v2134
      %v2199 = vsub.f32 %v2031, %v2135
      %v2200 = vsub.f32 %v2034, %v2136
      %v2201 = vsub.f32 %v2037, %v2137
      %v2202 = vsub.f32 %v2040, %v2138
      %v2203 = vsub.f32 %v2043, %v2139
      %v2204 = vsub.f32 %v2046, %v2140
      %v2205 = vsub.f32 %v2049, %v2141
      %v2206 = vsub.f32 %v2052, %v2142
      %v2207 = vsub.f32 %v2055, %v2143
      %v2208 = vsub.f32 %v2058, %v2144
      %v2209 = vsub.f32 %v2061, %v2145
      %v2210 = vsub.f32 %v2064, %v2146
      %v2211 = vsub.f32 %v2067, %v2147
      %v2212 = vsub.f32 %v2070, %v2148
      %v2213 = vsub.f32 %v2073, %v2149
      %v2214 = vsub.f32 %v2076, %v2150
      %v2215 = vsub.f32 %v2079, %v2151
      %v2216 = vsub.f32 %v2082, %v2152
      %v2217 = vsub.f32 %v2085, %v2153
      %v2218 = vsub.f32 %v2088, %v2154
      %v2219 = vsub.f32 %v2091, %v2155
      %vm2220 = vcmp.eq.s32.totalorder %v1451, 0
      %v2221 = vsel %vm2220, %v2156, %v1386
      %v2222 = vsel %vm2220, %v2157, %v1387
      %v2223 = vsel %vm2220, %v2158, %v1388
      %v2224 = vsel %vm2220, %v2159, %v1389
      %v2225 = vsel %vm2220, %v2160, %v1390
      %v2226 = vsel %vm2220, %v2161, %v1391
      %v2227 = vsel %vm2220, %v2162, %v1392
      %v2228 = vsel %vm2220, %v2163, %v1393
      %v2229 = vsel %vm2220, %v2164, %v1394
      %v2230 = vsel %vm2220, %v2165, %v1395
      %v2231 = vsel %vm2220, %v2166, %v1396
      %v2232 = vsel %vm2220, %v2167, %v1397
      %v2233 = vsel %vm2220, %v2168, %v1398
      %v2234 = vsel %vm2220, %v2169, %v1399
      %v2235 = vsel %vm2220, %v2170, %v1400
      %v2236 = vsel %vm2220, %v2171, %v1401
      %v2237 = vsel %vm2220, %v2172, %v1402
      %v2238 = vsel %vm2220, %v2173, %v1403
      %v2239 = vsel %vm2220, %v2174, %v1404
      %v2240 = vsel %vm2220, %v2175, %v1405
      %v2241 = vsel %vm2220, %v2176, %v1406
      %v2242 = vsel %vm2220, %v2177, %v1407
      %v2243 = vsel %vm2220, %v2178, %v1408
      %v2244 = vsel %vm2220, %v2179, %v1409
      %v2245 = vsel %vm2220, %v2180, %v1410
      %v2246 = vsel %vm2220, %v2181, %v1411
      %v2247 = vsel %vm2220, %v2182, %v1412
      %v2248 = vsel %vm2220, %v2183, %v1413
      %v2249 = vsel %vm2220, %v2184, %v1414
      %v2250 = vsel %vm2220, %v2185, %v1415
      %v2251 = vsel %vm2220, %v2186, %v1416
      %v2252 = vsel %vm2220, %v2187, %v1417
      %v2253 = vsel %vm2220, %v2188, %v1418
      %v2254 = vsel %vm2220, %v2189, %v1419
      %v2255 = vsel %vm2220, %v2190, %v1420
      %v2256 = vsel %vm2220, %v2191, %v1421
      %v2257 = vsel %vm2220, %v2192, %v1422
      %v2258 = vsel %vm2220, %v2193, %v1423
      %v2259 = vsel %vm2220, %v2194, %v1424
      %v2260 = vsel %vm2220, %v2195, %v1425
      %v2261 = vsel %vm2220, %v2196, %v1426
      %v2262 = vsel %vm2220, %v2197, %v1427
      %v2263 = vsel %vm2220, %v2198, %v1428
      %v2264 = vsel %vm2220, %v2199, %v1429
      %v2265 = vsel %vm2220, %v2200, %v1430
      %v2266 = vsel %vm2220, %v2201, %v1431
      %v2267 = vsel %vm2220, %v2202, %v1432
      %v2268 = vsel %vm2220, %v2203, %v1433
      %v2269 = vsel %vm2220, %v2204, %v1434
      %v2270 = vsel %vm2220, %v2205, %v1435
      %v2271 = vsel %vm2220, %v2206, %v1436
      %v2272 = vsel %vm2220, %v2207, %v1437
      %v2273 = vsel %vm2220, %v2208, %v1438
      %v2274 = vsel %vm2220, %v2209, %v1439
      %v2275 = vsel %vm2220, %v2210, %v1440
      %v2276 = vsel %vm2220, %v2211, %v1441
      %v2277 = vsel %vm2220, %v2212, %v1442
      %v2278 = vsel %vm2220, %v2213, %v1443
      %v2279 = vsel %vm2220, %v2214, %v1444
      %v2280 = vsel %vm2220, %v2215, %v1445
      %v2281 = vsel %vm2220, %v2216, %v1446
      %v2282 = vsel %vm2220, %v2217, %v1447
      %v2283 = vsel %vm2220, %v2218, %v1448
      %v2284 = vsel %vm2220, %v2219, %v1449
      %vm2285 = vcmask 15360
      %2286 = vst.msk [vmem:[%s167] sm:$0xff] %vm2285, %v2221
      %2287 = vst.msk [vmem:[%s167 + $0x8] sm:$0xff] %vm2285, %v2222
      %2288 = vst.msk [vmem:[%s167 + $0x10] sm:$0xff] %vm2285, %v2223
      %2289 = vst.msk [vmem:[%s167 + $0x18] sm:$0xff] %vm2285, %v2224
      %2290 = vst.msk [vmem:[%s167 + $0x20] sm:$0xff] %vm2285, %v2225
      %2291 = vst.msk [vmem:[%s167 + $0x28] sm:$0xff] %vm2285, %v2226
      %2292 = vst.msk [vmem:[%s167 + $0x30] sm:$0xff] %vm2285, %v2227
      %2293 = vst.msk [vmem:[%s167 + $0x38] sm:$0xff] %vm2285, %v2228
      %2294 = vst.msk [vmem:[%s167 + $0x40] sm:$0xff] %vm2285, %v2229
      %2295 = vst.msk [vmem:[%s167 + $0x48] sm:$0xff] %vm2285, %v2230
      %2296 = vst.msk [vmem:[%s167 + $0x50] sm:$0xff] %vm2285, %v2231
      %2297 = vst.msk [vmem:[%s167 + $0x58] sm:$0xff] %vm2285, %v2232
      %2298 = vst.msk [vmem:[%s167 + $0x60] sm:$0xff] %vm2285, %v2233
      %2299 = vst.msk [vmem:[%s167 + $0x68] sm:$0xff] %vm2285, %v2234
      %2300 = vst.msk [vmem:[%s167 + $0x70] sm:$0xff] %vm2285, %v2235
      %2301 = vst.msk [vmem:[%s167 + $0x78] sm:$0xff] %vm2285, %v2236
      %2302 = vst.msk [vmem:[%s167 + $0x80] sm:$0xff] %vm2285, %v2237
      %2303 = vst.msk [vmem:[%s167 + $0x88] sm:$0xff] %vm2285, %v2238
      %2304 = vst.msk [vmem:[%s167 + $0x90] sm:$0xff] %vm2285, %v2239
      %2305 = vst.msk [vmem:[%s167 + $0x98] sm:$0xff] %vm2285, %v2240
      %2306 = vst.msk [vmem:[%s167 + $0xa0] sm:$0xff] %vm2285, %v2241
      %2307 = vst.msk [vmem:[%s167 + $0xa8] sm:$0xff] %vm2285, %v2242
      %2308 = vst.msk [vmem:[%s167 + $0xb0] sm:$0xff] %vm2285, %v2243
      %2309 = vst.msk [vmem:[%s167 + $0xb8] sm:$0xff] %vm2285, %v2244
      %2310 = vst.msk [vmem:[%s167 + $0xc0] sm:$0xff] %vm2285, %v2245
      %2311 = vst.msk [vmem:[%s167 + $0xc8] sm:$0xff] %vm2285, %v2246
      %2312 = vst.msk [vmem:[%s167 + $0xd0] sm:$0xff] %vm2285, %v2247
      %2313 = vst.msk [vmem:[%s167 + $0xd8] sm:$0xff] %vm2285, %v2248
      %2314 = vst.msk [vmem:[%s167 + $0xe0] sm:$0xff] %vm2285, %v2249
      %2315 = vst.msk [vmem:[%s167 + $0xe8] sm:$0xff] %vm2285, %v2250
      %2316 = vst.msk [vmem:[%s167 + $0xf0] sm:$0xff] %vm2285, %v2251
      %2317 = vst.msk [vmem:[%s167 + $0xf8] sm:$0xff] %vm2285, %v2252
      %2318 = vst.msk [vmem:[%s167 + $0x100] sm:$0xff] %vm2285, %v2253
      %2319 = vst.msk [vmem:[%s167 + $0x108] sm:$0xff] %vm2285, %v2254
      %2320 = vst.msk [vmem:[%s167 + $0x110] sm:$0xff] %vm2285, %v2255
      %2321 = vst.msk [vmem:[%s167 + $0x118] sm:$0xff] %vm2285, %v2256
      %2322 = vst.msk [vmem:[%s167 + $0x120] sm:$0xff] %vm2285, %v2257
      %2323 = vst.msk [vmem:[%s167 + $0x128] sm:$0xff] %vm2285, %v2258
      %2324 = vst.msk [vmem:[%s167 + $0x130] sm:$0xff] %vm2285, %v2259
      %2325 = vst.msk [vmem:[%s167 + $0x138] sm:$0xff] %vm2285, %v2260
      %2326 = vst.msk [vmem:[%s167 + $0x140] sm:$0xff] %vm2285, %v2261
      %2327 = vst.msk [vmem:[%s167 + $0x148] sm:$0xff] %vm2285, %v2262
      %2328 = vst.msk [vmem:[%s167 + $0x150] sm:$0xff] %vm2285, %v2263
      %2329 = vst.msk [vmem:[%s167 + $0x158] sm:$0xff] %vm2285, %v2264
      %2330 = vst.msk [vmem:[%s167 + $0x160] sm:$0xff] %vm2285, %v2265
      %2331 = vst.msk [vmem:[%s167 + $0x168] sm:$0xff] %vm2285, %v2266
      %2332 = vst.msk [vmem:[%s167 + $0x170] sm:$0xff] %vm2285, %v2267
      %2333 = vst.msk [vmem:[%s167 + $0x178] sm:$0xff] %vm2285, %v2268
      %2334 = vst.msk [vmem:[%s167 + $0x180] sm:$0xff] %vm2285, %v2269
      %2335 = vst.msk [vmem:[%s167 + $0x188] sm:$0xff] %vm2285, %v2270
      %2336 = vst.msk [vmem:[%s167 + $0x190] sm:$0xff] %vm2285, %v2271
      %2337 = vst.msk [vmem:[%s167 + $0x198] sm:$0xff] %vm2285, %v2272
      %2338 = vst.msk [vmem:[%s167 + $0x1a0] sm:$0xff] %vm2285, %v2273
      %2339 = vst.msk [vmem:[%s167 + $0x1a8] sm:$0xff] %vm2285, %v2274
      %2340 = vst.msk [vmem:[%s167 + $0x1b0] sm:$0xff] %vm2285, %v2275
      %2341 = vst.msk [vmem:[%s167 + $0x1b8] sm:$0xff] %vm2285, %v2276
      %2342 = vst.msk [vmem:[%s167 + $0x1c0] sm:$0xff] %vm2285, %v2277
      %2343 = vst.msk [vmem:[%s167 + $0x1c8] sm:$0xff] %vm2285, %v2278
      %2344 = vst.msk [vmem:[%s167 + $0x1d0] sm:$0xff] %vm2285, %v2279
      %2345 = vst.msk [vmem:[%s167 + $0x1d8] sm:$0xff] %vm2285, %v2280
      %2346 = vst.msk [vmem:[%s167 + $0x1e0] sm:$0xff] %vm2285, %v2281
      %2347 = vst.msk [vmem:[%s167 + $0x1e8] sm:$0xff] %vm2285, %v2282
      %2348 = vst.msk [vmem:[%s167 + $0x1f0] sm:$0xff] %vm2285, %v2283
      %2349 = vst.msk [vmem:[%s167 + $0x1f8] sm:$0xff] %vm2285, %v2284
      %s2350 = smul.u32 64, %s13
      %p2351 = scmp.lt.s32.totalorder %s2350, 127
      %s2352 = scalar_select %p2351, %s2350, 127
      %s2353 = smul.addr %s2352, 8
      %s2354 = scalar_lea.vmem %s2, %s2353
      // Predicated region
      $region29: #{tpu_custom_call.1} parent=27 // pred_check
        %p2355 = pneg %p83
      $region30: #{tpu_custom_call.1} parent=27 // pred_check_branch
        %2357 = sbr.rel (%p2355) target = $region32
      $region31: #{tpu_custom_call.1} parent=27 // pred_region
        %s2358 = smul.u32 64, %s13
      $region32: #{tpu_custom_call.1} parent=27 // pred_fallthru
        _
    $region28: #{tpu_custom_call.1} parent=5 // pred_fallthru
      _
    %p2359 = scmp.le.s32.totalorder 2, %s8
    // Predicated region
    $region33: #{tpu_custom_call.1} parent=5 // pred_check
      %p2360 = pneg %p2359
    $region34: #{tpu_custom_call.1} parent=5 // pred_check_branch
      %2362 = sbr.rel (%p2360) target = $region36
    $region35: #{tpu_custom_call.1} parent=5 // pred_region
      %s2363 = ssub.s32 %s8, 2
      // Predicated region
      $region37: #{tpu_custom_call.1} parent=35 // pred_check
        %p2364 = pneg %p89
      $region38: #{tpu_custom_call.1} parent=35 // pred_check_branch
        %2366 = sbr.rel (%p2364) target = $region40
      $region39: #{tpu_custom_call.1} parent=35 // pred_region
        %s2367 = smul.u32 64, %s14
        %p2368 = scmp.lt.s32.totalorder %s2367, 127
        %s2369 = scalar_select %p2368, %s2367, 127
        %s2370 = smul.addr %s2369, 8
        %s2371 = scalar_lea.vmem %s2, %s2370
      $region40: #{tpu_custom_call.1} parent=35 // pred_fallthru
        _
    $region36: #{tpu_custom_call.1} parent=5 // pred_fallthru
      _
  $region6: #{tpu_custom_call.1} parent=0 // loop_footer
    %s12 = sadd.s32 1, %s8
  $region7: #{tpu_custom_call.1} parent=0 // loop_footer_branch
    %7 = sbr.rel target = $region3
  $region8: #{tpu_custom_call.1} parent=0 // loop_exit
    _

</llo_original>
